<compile_context>
chip_gen: v7x
topology: tpu7x:2x2x1
jax: 0.10.0
libtpu: 0.0.40
codegen_flags: <defaults>
</compile_context>

<pallas_src>
import functools
import math

import jax
import jax.numpy as jnp
from jax.experimental import pallas as pl
from jax.experimental.pallas import tpu as pltpu


# ---------------------------------------------------------------------------
# In-kernel helpers (pure elementwise / reduction ops, all Mosaic-lowerable).
# ---------------------------------------------------------------------------
def _layernorm(x, w, b, eps=1e-6):
    mu = jnp.mean(x, axis=-1, keepdims=True)
    xc = x - mu
    var = jnp.mean(xc * xc, axis=-1, keepdims=True)
    return xc * jax.lax.rsqrt(var + eps) * w + b


def _erf(x):
    # Abramowitz & Stegun 7.1.26 polynomial erf (max abs err ~1.5e-7 — float32
    # accurate), guaranteed to lower with only elementwise ops + one exp (EUP).
    a1, a2, a3, a4, a5 = 0.254829592, -0.284496736, 1.421413741, -1.453152027, 1.061405429
    p = 0.3275911
    s = jnp.where(x >= 0.0, 1.0, -1.0)
    ax = jnp.abs(x)
    t = 1.0 / (1.0 + p * ax)
    poly = ((((a5 * t + a4) * t + a3) * t + a2) * t + a1) * t
    return s * (1.0 - poly * jnp.exp(-ax * ax))


def _gelu_exact(x):
    # nn.GELU default (erf-based, not tanh approximation)
    return 0.5 * x * (1.0 + _erf(x * (1.0 / math.sqrt(2.0))))


# ---------------------------------------------------------------------------
# Fused encoder kernel: grid = (layer, batch); layer outermost so each layer's
# weights are streamed from HBM exactly once.
# ---------------------------------------------------------------------------
_PARAM_ORDER = ["ln1_w", "ln1_b", "wqkv", "bqkv", "wo", "bo", "gamma1",
                "ln2_w", "ln2_b", "w1", "b1", "w2", "b2", "gamma2"]


def encoder_kernel(x_ref, pos_ref,
                   ln1_w_ref, ln1_b_ref, wqkv_ref, bqkv_ref, wo_ref, bo_ref, g1_ref,
                   ln2_w_ref, ln2_b_ref, w1_ref, b1_ref, w2_ref, b2_ref, g2_ref,
                   fw_ref, fb_ref,
                   out_ref, *, num_heads):
    l = pl.program_id(0)
    b = pl.program_id(1)
    num_layers = pl.num_programs(0)

    # Layer 0: initialize the residual-stream carry (held in the resident
    # output block; written back to HBM only once, at the end of the grid).
    @pl.when(l == 0)
    def _():
        out_ref[b] = x_ref[b] + pos_ref[0]

    x = out_ref[b]                           # (S, D) float32 residual stream
    S, D = x.shape
    H = num_heads
    dh = D // H
    scale = 1.0 / math.sqrt(dh)
    bf16 = jnp.bfloat16

    # ---------------- attention branch: x = x + g1 * MHA(LN1(x)) ------------
    h = _layernorm(x, ln1_w_ref[0], ln1_b_ref[0])           # (S, D) f32
    hb = jnp.broadcast_to(h.astype(bf16), (H, S, D))        # head-batched LHS

    wqkv = wqkv_ref[0]                                      # (3H, D, dh) bf16
    bqkv = bqkv_ref[0]                                      # (3H, 1, dh) f32
    q = jnp.einsum('hsd,hde->hse', hb, wqkv[0:H],
                   preferred_element_type=jnp.float32) + bqkv[0:H]
    k = jnp.einsum('hsd,hde->hse', hb, wqkv[H:2 * H],
                   preferred_element_type=jnp.float32) + bqkv[H:2 * H]
    v = jnp.einsum('hsd,hde->hse', hb, wqkv[2 * H:3 * H],
                   preferred_element_type=jnp.float32) + bqkv[2 * H:3 * H]
    q = q * scale                                            # (H, S, dh) f32

    # TODO(synk): for large S, add a sequence-tile grid axis with online
    #             softmax (flash-style); whole-S score blocks are fine here.
    s = jnp.einsum('hqd,hkd->hqk', q.astype(bf16), k.astype(bf16),
                   preferred_element_type=jnp.float32)       # (H, S, S) f32
    s = s - jnp.max(s, axis=-1, keepdims=True)
    p = jnp.exp(s)
    p = p * pl.reciprocal(jnp.sum(p, axis=-1, keepdims=True), approx=True)

    o = jnp.einsum('hqk,hkd->hqd', p.astype(bf16), v.astype(bf16),
                   preferred_element_type=jnp.float32)       # (H, S, dh)
    proj = jnp.einsum('hqd,hde->hqe', o.astype(bf16), wo_ref[0],
                      preferred_element_type=jnp.float32)    # (H, S, D)
    attn = jnp.sum(proj, axis=0) + bo_ref[0]                 # (S, D)
    x = x + g1_ref[0] * attn

    # ---------------- MLP branch: x = x + g2 * MLP(LN2(x)) ------------------
    h2 = _layernorm(x, ln2_w_ref[0], ln2_b_ref[0])
    h2 = jnp.dot(h2.astype(bf16), w1_ref[0],
                 preferred_element_type=jnp.float32) + b1_ref[0]
    h2 = _gelu_exact(h2)
    h2 = jnp.dot(h2.astype(bf16), w2_ref[0],
                 preferred_element_type=jnp.float32) + b2_ref[0]
    x = x + g2_ref[0] * h2

    # Store the updated residual stream back into the resident carry.
    out_ref[b] = x

    # Last layer: apply the final LayerNorm in-place; HBM writeback happens
    # once when the grid finishes (out block index is grid-invariant).
    @pl.when(l == num_layers - 1)
    def _():
        out_ref[b] = _layernorm(x, fw_ref[...], fb_ref[...])


def enc_forward(x, pos, stacked, final_ln_w, final_ln_b, *, num_heads):
    B, S, D = x.shape
    L = stacked["ln1_w"].shape[0]

    in_specs = [
        pl.BlockSpec((B, S, D), lambda l, b: (0, 0, 0)),   # x (grid-invariant -> resident)
        pl.BlockSpec((1, S, D), lambda l, b: (0, 0, 0)),   # pos embedding (resident)
    ]
    params = []
    for name in _PARAM_ORDER:
        p = stacked[name]
        params.append(p)
        blk = (1,) + p.shape[1:]
        nz = p.ndim - 1
        # layer index on the OUTER grid axis -> each layer slice DMA'd once.
        in_specs.append(pl.BlockSpec(blk, lambda l, b, _nz=nz: (l,) + (0,) * _nz))
    in_specs += [
        pl.BlockSpec((1, D), lambda l, b: (0, 0)),         # final LN weight
        pl.BlockSpec((1, D), lambda l, b: (0, 0)),         # final LN bias
    ]

    return pl.pallas_call(
        functools.partial(encoder_kernel, num_heads=num_heads),
        out_shape=jax.ShapeDtypeStruct((B, S, D), jnp.float32),
        grid=(L, B),
        in_specs=in_specs,
        # Output block is grid-invariant: it doubles as the residual-stream
        # carry in VMEM and is written back to HBM exactly once.
        out_specs=pl.BlockSpec((B, S, D), lambda l, b: (0, 0, 0)),
        compiler_params=pltpu.CompilerParams(
            dimension_semantics=("arbitrary", "arbitrary")),
    )(x, pos, *params, final_ln_w, final_ln_b)


# ---------------------------------------------------------------------------
# Deterministic parameter initialization (shapes follow the torch __init__,
# attention weights laid out head-major for the batched kernel; bf16 weights).
# ---------------------------------------------------------------------------
def init_params(key, num_layers, seq, hidden, mlp, num_heads, init_values=0.1):
    dh = hidden // num_heads
    keys = jax.random.split(key, 1 + num_layers)
    pos = (0.02 * jax.random.normal(keys[0], (1, seq, hidden))).astype(jnp.float32)
    final_w = jnp.ones((1, hidden), jnp.float32)
    final_b = jnp.zeros((1, hidden), jnp.float32)
    per_layer = []
    for i in range(num_layers):
        k = jax.random.split(keys[1 + i], 8)
        per_layer.append(dict(
            ln1_w=jnp.ones((1, hidden), jnp.float32),
            ln1_b=jnp.zeros((1, hidden), jnp.float32),
            # head-major qkv weight: rows [0:H)=q heads, [H:2H)=k heads, [2H:3H)=v heads
            wqkv=(0.02 * jax.random.normal(k[0], (3 * num_heads, hidden, dh))).astype(jnp.bfloat16),
            bqkv=(0.02 * jax.random.normal(k[1], (3 * num_heads, 1, dh))).astype(jnp.float32),
            wo=(0.02 * jax.random.normal(k[2], (num_heads, dh, hidden))).astype(jnp.bfloat16),
            bo=(0.02 * jax.random.normal(k[3], (1, hidden))).astype(jnp.float32),
            gamma1=(init_values * jnp.ones((1, hidden))).astype(jnp.float32),
            ln2_w=jnp.ones((1, hidden), jnp.float32),
            ln2_b=jnp.zeros((1, hidden), jnp.float32),
            w1=(0.02 * jax.random.normal(k[4], (hidden, mlp))).astype(jnp.bfloat16),
            b1=(1e-6 * jax.random.normal(k[5], (1, mlp))).astype(jnp.float32),
            w2=(0.02 * jax.random.normal(k[6], (mlp, hidden))).astype(jnp.bfloat16),
            b2=(1e-6 * jax.random.normal(k[7], (1, hidden))).astype(jnp.float32),
            gamma2=(init_values * jnp.ones((1, hidden))).astype(jnp.float32),
        ))
    stacked = {n: jnp.stack([lyr[n] for lyr in per_layer], axis=0) for n in _PARAM_ORDER}
    return pos, stacked, final_w, final_b


# ---------------------------------------------------------------------------
# Pure-JAX reference (same bf16-quantized weights, f32 math) for verification.
# ---------------------------------------------------------------------------
def enc_reference(x, pos, stacked, final_ln_w, final_ln_b, *, num_heads):
    H = num_heads

    def ln(v, w, b, eps=1e-6):
        mu = jnp.mean(v, axis=-1, keepdims=True)
        var = jnp.mean((v - mu) ** 2, axis=-1, keepdims=True)
        return (v - mu) / jnp.sqrt(var + eps) * w + b

    x = x + pos
    L = stacked["ln1_w"].shape[0]
    for i in range(L):
        g = {n: stacked[n][i].astype(jnp.float32) for n in _PARAM_ORDER}
        h = ln(x, g["ln1_w"], g["ln1_b"])
        qkv = jnp.einsum("bsd,hde->bhse", h, g["wqkv"]) + g["bqkv"][None]   # (B,3H,S,dh)
        q, k, v = qkv[:, :H], qkv[:, H:2 * H], qkv[:, 2 * H:]
        dh = q.shape[-1]
        s = jnp.einsum("bhqd,bhkd->bhqk", q, k) / math.sqrt(dh)
        p = jax.nn.softmax(s, axis=-1)
        o = jnp.einsum("bhqk,bhkd->bhqd", p, v)
        attn = jnp.einsum("bhqd,hde->bqe", o, g["wo"]) + g["bo"]
        x = x + g["gamma1"] * attn
        h2 = ln(x, g["ln2_w"], g["ln2_b"])
        h2 = h2 @ g["w1"] + g["b1"]
        h2 = 0.5 * h2 * (1.0 + jax.scipy.special.erf(h2 / math.sqrt(2.0)))
        h2 = h2 @ g["w2"] + g["b2"]
        x = x + g["gamma2"] * h2
    return ln(x, final_ln_w, final_ln_b)


if __name__ == "__main__":
    # Enc(seq_length=8, num_layers=2, num_heads=4, hidden_dim=32, mlp_dim=64,
    #     dropout=0.0, attention_dropout=0.0, drop_path=[0.1, 0.1], init_values=0.1)
    B, S, D, H, M, L = 2, 8, 32, 4, 64, 2
    key = jax.random.PRNGKey(0)
    kx, kp = jax.random.split(key)
    x = jax.random.normal(kx, (B, S, D), jnp.float32)

    pos, stacked, ln_w, ln_b = init_params(kp, L, S, D, M, H, init_values=0.1)

    out = enc_forward(x, pos, stacked, ln_w, ln_b, num_heads=H)
    out = jax.block_until_ready(out)
    assert out.shape == (B, S, D) and out.dtype == jnp.float32

    ref = enc_reference(x, pos, stacked, ln_w, ln_b, num_heads=H)
    err = float(jnp.max(jnp.abs(out - ref)))
    assert err < 5e-2, f"max abs error vs reference: {err}"
    print("KERNEL_OK")
</pallas_src>

<mosaic_0001>
module attributes {stable_mosaic.version = 11 : i64} {
  func.func @encoder_kernel(%arg0: i32, %arg1: i32, %arg2: memref<2x8x32xf32, #tpu.memory_space<vmem>>, %arg3: memref<1x8x32xf32, #tpu.memory_space<vmem>>, %arg4: memref<1x1x32xf32, #tpu.memory_space<vmem>>, %arg5: memref<1x1x32xf32, #tpu.memory_space<vmem>>, %arg6: memref<1x12x32x8xbf16, #tpu.memory_space<vmem>>, %arg7: memref<1x12x1x8xf32, #tpu.memory_space<vmem>>, %arg8: memref<1x4x8x32xbf16, #tpu.memory_space<vmem>>, %arg9: memref<1x1x32xf32, #tpu.memory_space<vmem>>, %arg10: memref<1x1x32xf32, #tpu.memory_space<vmem>>, %arg11: memref<1x1x32xf32, #tpu.memory_space<vmem>>, %arg12: memref<1x1x32xf32, #tpu.memory_space<vmem>>, %arg13: memref<1x32x64xbf16, #tpu.memory_space<vmem>>, %arg14: memref<1x1x64xf32, #tpu.memory_space<vmem>>, %arg15: memref<1x64x32xbf16, #tpu.memory_space<vmem>>, %arg16: memref<1x1x32xf32, #tpu.memory_space<vmem>>, %arg17: memref<1x1x32xf32, #tpu.memory_space<vmem>>, %arg18: memref<1x32xf32, #tpu.memory_space<vmem>>, %arg19: memref<1x32xf32, #tpu.memory_space<vmem>>, %arg20: memref<2x8x32xf32, #tpu.memory_space<vmem>>) attributes {dimension_semantics = [#tpu.dimension_semantics<arbitrary>, #tpu.dimension_semantics<arbitrary>], iteration_bounds = array<i64: 2, 2>, scalar_prefetch = 0 : i64, scratch_operands = 0 : i64, tpu.core_type = #tpu.core_type<tc>, window_params = [{pipeline_mode = #tpu.pipeline_mode<synchronous>, transform_indices = @transform_0, window_bounds = array<i64: 2, 8, 32>}, {pipeline_mode = #tpu.pipeline_mode<synchronous>, transform_indices = @transform_1, window_bounds = array<i64: 1, 8, 32>}, {transform_indices = @transform_2, window_bounds = array<i64: 1, 1, 32>}, {transform_indices = @transform_3, window_bounds = array<i64: 1, 1, 32>}, {transform_indices = @transform_4, window_bounds = array<i64: 1, 12, 32, 8>}, {transform_indices = @transform_5, window_bounds = array<i64: 1, 12, 1, 8>}, {transform_indices = @transform_6, window_bounds = array<i64: 1, 4, 8, 32>}, {transform_indices = @transform_7, window_bounds = array<i64: 1, 1, 32>}, {transform_indices = @transform_8, window_bounds = array<i64: 1, 1, 32>}, {transform_indices = @transform_9, window_bounds = array<i64: 1, 1, 32>}, {transform_indices = @transform_10, window_bounds = array<i64: 1, 1, 32>}, {transform_indices = @transform_11, window_bounds = array<i64: 1, 32, 64>}, {transform_indices = @transform_12, window_bounds = array<i64: 1, 1, 64>}, {transform_indices = @transform_13, window_bounds = array<i64: 1, 64, 32>}, {transform_indices = @transform_14, window_bounds = array<i64: 1, 1, 32>}, {transform_indices = @transform_15, window_bounds = array<i64: 1, 1, 32>}, {pipeline_mode = #tpu.pipeline_mode<synchronous>, transform_indices = @transform_16, window_bounds = array<i64: 1, 32>}, {pipeline_mode = #tpu.pipeline_mode<synchronous>, transform_indices = @transform_17, window_bounds = array<i64: 1, 32>}, {pipeline_mode = #tpu.pipeline_mode<synchronous>, transform_indices = @transform_18, window_bounds = array<i64: 2, 8, 32>}]} {
    %c0_i32 = arith.constant 0 : i32
    %0 = arith.cmpi eq, %arg0, %c0_i32 : i32
    %1 = arith.extui %0 : i1 to i32
    %c0_i32_0 = arith.constant 0 : i32
    %2 = arith.cmpi ne, %1, %c0_i32_0 : i32
    scf.if %2 {
      %177 = arith.index_cast %arg1 : i32 to index
      %c0_87 = arith.constant 0 : index
      %c0_88 = arith.constant 0 : index
      %178 = vector.load %arg2[%177, %c0_87, %c0_88] : memref<2x8x32xf32, #tpu.memory_space<vmem>>, vector<1x8x32xf32>
      %179 = vector.shape_cast %178 : vector<1x8x32xf32> to vector<8x32xf32>
      %c0_89 = arith.constant 0 : index
      %c0_90 = arith.constant 0 : index
      %c0_91 = arith.constant 0 : index
      %180 = vector.load %arg3[%c0_89, %c0_90, %c0_91] : memref<1x8x32xf32, #tpu.memory_space<vmem>>, vector<1x8x32xf32>
      %181 = vector.shape_cast %180 : vector<1x8x32xf32> to vector<8x32xf32>
      %182 = arith.addf %179, %181 : vector<8x32xf32>
      %183 = arith.index_cast %arg1 : i32 to index
      %c0_92 = arith.constant 0 : index
      %c0_93 = arith.constant 0 : index
      %184 = vector.load %arg20[%183, %c0_92, %c0_93] : memref<2x8x32xf32, #tpu.memory_space<vmem>>, vector<1x8x32xf32>
      %185 = vector.shape_cast %184 : vector<1x8x32xf32> to vector<8x32xf32>
      %186 = vector.shape_cast %182 : vector<8x32xf32> to vector<1x8x32xf32>
      tpu.vector_store %arg20[%183, %c0_92, %c0_93], %186 {strides = array<i32>} : memref<2x8x32xf32, #tpu.memory_space<vmem>>, vector<1x8x32xf32>,
    } else {
    }
    %3 = arith.index_cast %arg1 : i32 to index
    %c0 = arith.constant 0 : index
    %c0_1 = arith.constant 0 : index
    %4 = vector.load %arg20[%3, %c0, %c0_1] : memref<2x8x32xf32, #tpu.memory_space<vmem>>, vector<1x8x32xf32>
    %5 = vector.shape_cast %4 : vector<1x8x32xf32> to vector<8x32xf32>
    %c0_2 = arith.constant 0 : index
    %c0_3 = arith.constant 0 : index
    %c0_4 = arith.constant 0 : index
    %6 = vector.load %arg4[%c0_2, %c0_3, %c0_4] : memref<1x1x32xf32, #tpu.memory_space<vmem>>, vector<1x1x32xf32>
    %7 = vector.shape_cast %6 : vector<1x1x32xf32> to vector<1x32xf32>
    %c0_5 = arith.constant 0 : index
    %c0_6 = arith.constant 0 : index
    %c0_7 = arith.constant 0 : index
    %8 = vector.load %arg5[%c0_5, %c0_6, %c0_7] : memref<1x1x32xf32, #tpu.memory_space<vmem>>, vector<1x1x32xf32>
    %9 = vector.shape_cast %8 : vector<1x1x32xf32> to vector<1x32xf32>
    %cst = arith.constant dense<0.000000e+00> : vector<8xf32>
    %10 = vector.multi_reduction <add>, %5, %cst [1] : vector<8x32xf32> to vector<8xf32>
    %11 = vector.shape_cast %10 : vector<8xf32> to vector<8x1xf32>
    %cst_8 = arith.constant 3.200000e+01 : f32
    %12 = vector.broadcast %cst_8 : f32 to vector<8x1xf32>
    %13 = arith.divf %11, %12 : vector<8x1xf32>
    %14 = vector.broadcast %13 : vector<8x1xf32> to vector<8x32xf32>
    %15 = arith.subf %5, %14 : vector<8x32xf32>
    %16 = arith.mulf %15, %15 : vector<8x32xf32>
    %cst_9 = arith.constant dense<0.000000e+00> : vector<8xf32>
    %17 = vector.multi_reduction <add>, %16, %cst_9 [1] : vector<8x32xf32> to vector<8xf32>
    %18 = vector.shape_cast %17 : vector<8xf32> to vector<8x1xf32>
    %cst_10 = arith.constant 3.200000e+01 : f32
    %19 = vector.broadcast %cst_10 : f32 to vector<8x1xf32>
    %20 = arith.divf %18, %19 : vector<8x1xf32>
    %cst_11 = arith.constant 9.99999997E-7 : f32
    %21 = vector.broadcast %cst_11 : f32 to vector<8x1xf32>
    %22 = arith.addf %20, %21 : vector<8x1xf32>
    %23 = math.rsqrt %22 : vector<8x1xf32>
    %24 = vector.broadcast %23 : vector<8x1xf32> to vector<8x32xf32>
    %25 = arith.mulf %15, %24 : vector<8x32xf32>
    %26 = vector.broadcast %7 : vector<1x32xf32> to vector<8x32xf32>
    %27 = arith.mulf %25, %26 : vector<8x32xf32>
    %28 = vector.broadcast %9 : vector<1x32xf32> to vector<8x32xf32>
    %29 = arith.addf %27, %28 : vector<8x32xf32>
    %30 = arith.truncf %29 : vector<8x32xf32> to vector<8x32xbf16>
    %31 = vector.shape_cast %30 : vector<8x32xbf16> to vector<1x8x32xbf16>
    %32 = vector.broadcast %31 : vector<1x8x32xbf16> to vector<4x8x32xbf16>
    %c0_12 = arith.constant 0 : index
    %c0_13 = arith.constant 0 : index
    %c0_14 = arith.constant 0 : index
    %c0_15 = arith.constant 0 : index
    %33 = vector.load %arg6[%c0_12, %c0_13, %c0_14, %c0_15] : memref<1x12x32x8xbf16, #tpu.memory_space<vmem>>, vector<1x12x32x8xbf16>
    %34 = vector.shape_cast %33 : vector<1x12x32x8xbf16> to vector<12x32x8xbf16>
    %c0_16 = arith.constant 0 : index
    %c0_17 = arith.constant 0 : index
    %c0_18 = arith.constant 0 : index
    %c0_19 = arith.constant 0 : index
    %35 = vector.load %arg7[%c0_16, %c0_17, %c0_18, %c0_19] : memref<1x12x1x8xf32, #tpu.memory_space<vmem>>, vector<1x12x1x8xf32>
    %36 = vector.shape_cast %35 : vector<1x12x1x8xf32> to vector<12x1x8xf32>
    %37 = vector.extract_strided_slice %34 {offsets = [0, 0, 0], sizes = [4, 32, 8], strides = [1, 1, 1]} : vector<12x32x8xbf16> to vector<4x32x8xbf16>
    "tpu.trace_start"() <{level = 10 : i32, message = "hsd,hde->hse"}> : () -> ()
    %cst_20 = arith.constant dense<0.000000e+00> : vector<4x8x8xf32>
    %38 = tpu.matmul %32, %37, %cst_20 {dimension_numbers = #tpu.dot_dimension_numbers<[2], [1], [1], [2], [0, 0, 0, 1, 1, 2], [0], [0]>} : vector<4x8x32xbf16>, vector<4x32x8xbf16>, vector<4x8x8xf32> -> vector<4x8x8xf32>
    "tpu.trace_stop"() : () -> ()
    %39 = vector.extract_strided_slice %36 {offsets = [0, 0, 0], sizes = [4, 1, 8], strides = [1, 1, 1]} : vector<12x1x8xf32> to vector<4x1x8xf32>
    %40 = vector.broadcast %39 : vector<4x1x8xf32> to vector<4x8x8xf32>
    %41 = arith.addf %38, %40 : vector<4x8x8xf32>
    %42 = vector.extract_strided_slice %34 {offsets = [4, 0, 0], sizes = [4, 32, 8], strides = [1, 1, 1]} : vector<12x32x8xbf16> to vector<4x32x8xbf16>
    "tpu.trace_start"() <{level = 10 : i32, message = "hsd,hde->hse"}> : () -> ()
    %cst_21 = arith.constant dense<0.000000e+00> : vector<4x8x8xf32>
    %43 = tpu.matmul %32, %42, %cst_21 {dimension_numbers = #tpu.dot_dimension_numbers<[2], [1], [1], [2], [0, 0, 0, 1, 1, 2], [0], [0]>} : vector<4x8x32xbf16>, vector<4x32x8xbf16>, vector<4x8x8xf32> -> vector<4x8x8xf32>
    "tpu.trace_stop"() : () -> ()
    %44 = vector.extract_strided_slice %36 {offsets = [4, 0, 0], sizes = [4, 1, 8], strides = [1, 1, 1]} : vector<12x1x8xf32> to vector<4x1x8xf32>
    %45 = vector.broadcast %44 : vector<4x1x8xf32> to vector<4x8x8xf32>
    %46 = arith.addf %43, %45 : vector<4x8x8xf32>
    %47 = vector.extract_strided_slice %34 {offsets = [8, 0, 0], sizes = [4, 32, 8], strides = [1, 1, 1]} : vector<12x32x8xbf16> to vector<4x32x8xbf16>
    "tpu.trace_start"() <{level = 10 : i32, message = "hsd,hde->hse"}> : () -> ()
    %cst_22 = arith.constant dense<0.000000e+00> : vector<4x8x8xf32>
    %48 = tpu.matmul %32, %47, %cst_22 {dimension_numbers = #tpu.dot_dimension_numbers<[2], [1], [1], [2], [0, 0, 0, 1, 1, 2], [0], [0]>} : vector<4x8x32xbf16>, vector<4x32x8xbf16>, vector<4x8x8xf32> -> vector<4x8x8xf32>
    "tpu.trace_stop"() : () -> ()
    %49 = vector.extract_strided_slice %36 {offsets = [8, 0, 0], sizes = [4, 1, 8], strides = [1, 1, 1]} : vector<12x1x8xf32> to vector<4x1x8xf32>
    %50 = vector.broadcast %49 : vector<4x1x8xf32> to vector<4x8x8xf32>
    %51 = arith.addf %48, %50 : vector<4x8x8xf32>
    %cst_23 = arith.constant 0.353553385 : f32
    %52 = vector.broadcast %cst_23 : f32 to vector<4x8x8xf32>
    %53 = arith.mulf %41, %52 : vector<4x8x8xf32>
    %54 = arith.truncf %53 : vector<4x8x8xf32> to vector<4x8x8xbf16>
    %55 = arith.truncf %46 : vector<4x8x8xf32> to vector<4x8x8xbf16>
    "tpu.trace_start"() <{level = 10 : i32, message = "hqd,hkd->hqk"}> : () -> ()
    %cst_24 = arith.constant dense<0.000000e+00> : vector<4x8x8xf32>
    %56 = tpu.matmul %54, %55, %cst_24 {dimension_numbers = #tpu.dot_dimension_numbers<[2], [2], [1], [1], [0, 0, 0, 1, 1, 1], [0], [0]>} : vector<4x8x8xbf16>, vector<4x8x8xbf16>, vector<4x8x8xf32> -> vector<4x8x8xf32>
    "tpu.trace_stop"() : () -> ()
    %cst_25 = arith.constant dense<0xFF800000> : vector<4x8xf32>
    %57 = vector.multi_reduction <maximumf>, %56, %cst_25 [2] : vector<4x8x8xf32> to vector<4x8xf32>
    %58 = vector.shape_cast %57 : vector<4x8xf32> to vector<4x8x1xf32>
    %59 = vector.broadcast %58 : vector<4x8x1xf32> to vector<4x8x8xf32>
    %60 = arith.subf %56, %59 : vector<4x8x8xf32>
    %61 = math.exp %60 : vector<4x8x8xf32>
    %cst_26 = arith.constant dense<0.000000e+00> : vector<4x8xf32>
    %62 = vector.multi_reduction <add>, %61, %cst_26 [2] : vector<4x8x8xf32> to vector<4x8xf32>
    %63 = vector.shape_cast %62 : vector<4x8xf32> to vector<4x8x1xf32>
    %64 = tpu.reciprocal %63 {approx = true} : vector<4x8x1xf32> -> vector<4x8x1xf32>
    %65 = vector.broadcast %64 : vector<4x8x1xf32> to vector<4x8x8xf32>
    %66 = arith.mulf %61, %65 : vector<4x8x8xf32>
    %67 = arith.truncf %66 : vector<4x8x8xf32> to vector<4x8x8xbf16>
    %68 = arith.truncf %51 : vector<4x8x8xf32> to vector<4x8x8xbf16>
    "tpu.trace_start"() <{level = 10 : i32, message = "hqk,hkd->hqd"}> : () -> ()
    %cst_27 = arith.constant dense<0.000000e+00> : vector<4x8x8xf32>
    %69 = tpu.matmul %67, %68, %cst_27 {dimension_numbers = #tpu.dot_dimension_numbers<[2], [1], [1], [2], [0, 0, 0, 1, 1, 2], [0], [0]>} : vector<4x8x8xbf16>, vector<4x8x8xbf16>, vector<4x8x8xf32> -> vector<4x8x8xf32>
    "tpu.trace_stop"() : () -> ()
    %70 = arith.truncf %69 : vector<4x8x8xf32> to vector<4x8x8xbf16>
    %c0_28 = arith.constant 0 : index
    %c0_29 = arith.constant 0 : index
    %c0_30 = arith.constant 0 : index
    %c0_31 = arith.constant 0 : index
    %71 = vector.load %arg8[%c0_28, %c0_29, %c0_30, %c0_31] : memref<1x4x8x32xbf16, #tpu.memory_space<vmem>>, vector<1x4x8x32xbf16>
    %72 = vector.shape_cast %71 : vector<1x4x8x32xbf16> to vector<4x8x32xbf16>
    "tpu.trace_start"() <{level = 10 : i32, message = "hqd,hde->hqe"}> : () -> ()
    %cst_32 = arith.constant dense<0.000000e+00> : vector<4x8x32xf32>
    %73 = tpu.matmul %70, %72, %cst_32 {dimension_numbers = #tpu.dot_dimension_numbers<[2], [1], [1], [2], [0, 0, 0, 1, 1, 2], [0], [0]>} : vector<4x8x8xbf16>, vector<4x8x32xbf16>, vector<4x8x32xf32> -> vector<4x8x32xf32>
    "tpu.trace_stop"() : () -> ()
    %cst_33 = arith.constant dense<0.000000e+00> : vector<8x32xf32>
    %74 = vector.multi_reduction <add>, %73, %cst_33 [0] : vector<4x8x32xf32> to vector<8x32xf32>
    %c0_34 = arith.constant 0 : index
    %c0_35 = arith.constant 0 : index
    %c0_36 = arith.constant 0 : index
    %75 = vector.load %arg9[%c0_34, %c0_35, %c0_36] : memref<1x1x32xf32, #tpu.memory_space<vmem>>, vector<1x1x32xf32>
    %76 = vector.shape_cast %75 : vector<1x1x32xf32> to vector<1x32xf32>
    %77 = vector.broadcast %76 : vector<1x32xf32> to vector<8x32xf32>
    %78 = arith.addf %74, %77 : vector<8x32xf32>
    %c0_37 = arith.constant 0 : index
    %c0_38 = arith.constant 0 : index
    %c0_39 = arith.constant 0 : index
    %79 = vector.load %arg10[%c0_37, %c0_38, %c0_39] : memref<1x1x32xf32, #tpu.memory_space<vmem>>, vector<1x1x32xf32>
    %80 = vector.shape_cast %79 : vector<1x1x32xf32> to vector<1x32xf32>
    %81 = vector.broadcast %80 : vector<1x32xf32> to vector<8x32xf32>
    %82 = arith.mulf %81, %78 : vector<8x32xf32>
    %83 = arith.addf %5, %82 : vector<8x32xf32>
    %c0_40 = arith.constant 0 : index
    %c0_41 = arith.constant 0 : index
    %c0_42 = arith.constant 0 : index
    %84 = vector.load %arg11[%c0_40, %c0_41, %c0_42] : memref<1x1x32xf32, #tpu.memory_space<vmem>>, vector<1x1x32xf32>
    %85 = vector.shape_cast %84 : vector<1x1x32xf32> to vector<1x32xf32>
    %c0_43 = arith.constant 0 : index
    %c0_44 = arith.constant 0 : index
    %c0_45 = arith.constant 0 : index
    %86 = vector.load %arg12[%c0_43, %c0_44, %c0_45] : memref<1x1x32xf32, #tpu.memory_space<vmem>>, vector<1x1x32xf32>
    %87 = vector.shape_cast %86 : vector<1x1x32xf32> to vector<1x32xf32>
    %cst_46 = arith.constant dense<0.000000e+00> : vector<8xf32>
    %88 = vector.multi_reduction <add>, %83, %cst_46 [1] : vector<8x32xf32> to vector<8xf32>
    %89 = vector.shape_cast %88 : vector<8xf32> to vector<8x1xf32>
    %cst_47 = arith.constant 3.200000e+01 : f32
    %90 = vector.broadcast %cst_47 : f32 to vector<8x1xf32>
    %91 = arith.divf %89, %90 : vector<8x1xf32>
    %92 = vector.broadcast %91 : vector<8x1xf32> to vector<8x32xf32>
    %93 = arith.subf %83, %92 : vector<8x32xf32>
    %94 = arith.mulf %93, %93 : vector<8x32xf32>
    %cst_48 = arith.constant dense<0.000000e+00> : vector<8xf32>
    %95 = vector.multi_reduction <add>, %94, %cst_48 [1] : vector<8x32xf32> to vector<8xf32>
    %96 = vector.shape_cast %95 : vector<8xf32> to vector<8x1xf32>
    %cst_49 = arith.constant 3.200000e+01 : f32
    %97 = vector.broadcast %cst_49 : f32 to vector<8x1xf32>
    %98 = arith.divf %96, %97 : vector<8x1xf32>
    %cst_50 = arith.constant 9.99999997E-7 : f32
    %99 = vector.broadcast %cst_50 : f32 to vector<8x1xf32>
    %100 = arith.addf %98, %99 : vector<8x1xf32>
    %101 = math.rsqrt %100 : vector<8x1xf32>
    %102 = vector.broadcast %101 : vector<8x1xf32> to vector<8x32xf32>
    %103 = arith.mulf %93, %102 : vector<8x32xf32>
    %104 = vector.broadcast %85 : vector<1x32xf32> to vector<8x32xf32>
    %105 = arith.mulf %103, %104 : vector<8x32xf32>
    %106 = vector.broadcast %87 : vector<1x32xf32> to vector<8x32xf32>
    %107 = arith.addf %105, %106 : vector<8x32xf32>
    %108 = arith.truncf %107 : vector<8x32xf32> to vector<8x32xbf16>
    %c0_51 = arith.constant 0 : index
    %c0_52 = arith.constant 0 : index
    %c0_53 = arith.constant 0 : index
    %109 = vector.load %arg13[%c0_51, %c0_52, %c0_53] : memref<1x32x64xbf16, #tpu.memory_space<vmem>>, vector<1x32x64xbf16>
    %110 = vector.shape_cast %109 : vector<1x32x64xbf16> to vector<32x64xbf16>
    %cst_54 = arith.constant dense<0.000000e+00> : vector<8x64xf32>
    %111 = tpu.matmul %108, %110, %cst_54 {dimension_numbers = #tpu.dot_dimension_numbers<[1], [0], [0], [1], [0, 0, 1, 1], [], []>} : vector<8x32xbf16>, vector<32x64xbf16>, vector<8x64xf32> -> vector<8x64xf32>
    %c0_55 = arith.constant 0 : index
    %c0_56 = arith.constant 0 : index
    %c0_57 = arith.constant 0 : index
    %112 = vector.load %arg14[%c0_55, %c0_56, %c0_57] : memref<1x1x64xf32, #tpu.memory_space<vmem>>, vector<1x1x64xf32>
    %113 = vector.shape_cast %112 : vector<1x1x64xf32> to vector<1x64xf32>
    %114 = vector.broadcast %113 : vector<1x64xf32> to vector<8x64xf32>
    %115 = arith.addf %111, %114 : vector<8x64xf32>
    %cst_58 = arith.constant 5.000000e-01 : f32
    %116 = vector.broadcast %cst_58 : f32 to vector<8x64xf32>
    %117 = arith.mulf %116, %115 : vector<8x64xf32>
    %cst_59 = arith.constant 0.707106769 : f32
    %118 = vector.broadcast %cst_59 : f32 to vector<8x64xf32>
    %119 = arith.mulf %115, %118 : vector<8x64xf32>
    %cst_60 = arith.constant 0.000000e+00 : f32
    %120 = vector.broadcast %cst_60 : f32 to vector<8x64xf32>
    %121 = arith.cmpf oge, %119, %120 : vector<8x64xf32>
    %cst_61 = arith.constant 1.000000e+00 : f32
    %cst_62 = arith.constant -1.000000e+00 : f32
    %122 = vector.broadcast %cst_61 : f32 to vector<8x64xf32>
    %123 = vector.broadcast %cst_62 : f32 to vector<8x64xf32>
    %124 = arith.select %121, %122, %123 : vector<8x64xi1>, vector<8x64xf32>
    %125 = math.absf %119 : vector<8x64xf32>
    %cst_63 = arith.constant 0.327591091 : f32
    %126 = vector.broadcast %cst_63 : f32 to vector<8x64xf32>
    %127 = arith.mulf %126, %125 : vector<8x64xf32>
    %cst_64 = arith.constant 1.000000e+00 : f32
    %128 = vector.broadcast %cst_64 : f32 to vector<8x64xf32>
    %129 = arith.addf %128, %127 : vector<8x64xf32>
    %cst_65 = arith.constant 1.000000e+00 : f32
    %130 = vector.broadcast %cst_65 : f32 to vector<8x64xf32>
    %131 = arith.divf %130, %129 : vector<8x64xf32>
    %cst_66 = arith.constant 1.06140542 : f32
    %132 = vector.broadcast %cst_66 : f32 to vector<8x64xf32>
    %133 = arith.mulf %132, %131 : vector<8x64xf32>
    %cst_67 = arith.constant -1.45315206 : f32
    %134 = vector.broadcast %cst_67 : f32 to vector<8x64xf32>
    %135 = arith.addf %133, %134 : vector<8x64xf32>
    %136 = arith.mulf %135, %131 : vector<8x64xf32>
    %cst_68 = arith.constant 1.42141378 : f32
    %137 = vector.broadcast %cst_68 : f32 to vector<8x64xf32>
    %138 = arith.addf %136, %137 : vector<8x64xf32>
    %139 = arith.mulf %138, %131 : vector<8x64xf32>
    %cst_69 = arith.constant -0.284496725 : f32
    %140 = vector.broadcast %cst_69 : f32 to vector<8x64xf32>
    %141 = arith.addf %139, %140 : vector<8x64xf32>
    %142 = arith.mulf %141, %131 : vector<8x64xf32>
    %cst_70 = arith.constant 0.254829586 : f32
    %143 = vector.broadcast %cst_70 : f32 to vector<8x64xf32>
    %144 = arith.addf %142, %143 : vector<8x64xf32>
    %145 = arith.mulf %144, %131 : vector<8x64xf32>
    %cst_71 = arith.constant 0.000000e+00 : f32
    %146 = vector.broadcast %cst_71 : f32 to vector<8x64xf32>
    %147 = arith.subf %146, %125 : vector<8x64xf32>
    %148 = arith.mulf %147, %125 : vector<8x64xf32>
    %149 = math.exp %148 : vector<8x64xf32>
    %150 = arith.mulf %145, %149 : vector<8x64xf32>
    %cst_72 = arith.constant 1.000000e+00 : f32
    %151 = vector.broadcast %cst_72 : f32 to vector<8x64xf32>
    %152 = arith.subf %151, %150 : vector<8x64xf32>
    %153 = arith.mulf %124, %152 : vector<8x64xf32>
    %cst_73 = arith.constant 1.000000e+00 : f32
    %154 = vector.broadcast %cst_73 : f32 to vector<8x64xf32>
    %155 = arith.addf %154, %153 : vector<8x64xf32>
    %156 = arith.mulf %117, %155 : vector<8x64xf32>
    %157 = arith.truncf %156 : vector<8x64xf32> to vector<8x64xbf16>
    %c0_74 = arith.constant 0 : index
    %c0_75 = arith.constant 0 : index
    %c0_76 = arith.constant 0 : index
    %158 = vector.load %arg15[%c0_74, %c0_75, %c0_76] : memref<1x64x32xbf16, #tpu.memory_space<vmem>>, vector<1x64x32xbf16>
    %159 = vector.shape_cast %158 : vector<1x64x32xbf16> to vector<64x32xbf16>
    %cst_77 = arith.constant dense<0.000000e+00> : vector<8x32xf32>
    %160 = tpu.matmul %157, %159, %cst_77 {dimension_numbers = #tpu.dot_dimension_numbers<[1], [0], [0], [1], [0, 0, 1, 1], [], []>} : vector<8x64xbf16>, vector<64x32xbf16>, vector<8x32xf32> -> vector<8x32xf32>
    %c0_78 = arith.constant 0 : index
    %c0_79 = arith.constant 0 : index
    %c0_80 = arith.constant 0 : index
    %161 = vector.load %arg16[%c0_78, %c0_79, %c0_80] : memref<1x1x32xf32, #tpu.memory_space<vmem>>, vector<1x1x32xf32>
    %162 = vector.shape_cast %161 : vector<1x1x32xf32> to vector<1x32xf32>
    %163 = vector.broadcast %162 : vector<1x32xf32> to vector<8x32xf32>
    %164 = arith.addf %160, %163 : vector<8x32xf32>
    %c0_81 = arith.constant 0 : index
    %c0_82 = arith.constant 0 : index
    %c0_83 = arith.constant 0 : index
    %165 = vector.load %arg17[%c0_81, %c0_82, %c0_83] : memref<1x1x32xf32, #tpu.memory_space<vmem>>, vector<1x1x32xf32>
    %166 = vector.shape_cast %165 : vector<1x1x32xf32> to vector<1x32xf32>
    %167 = vector.broadcast %166 : vector<1x32xf32> to vector<8x32xf32>
    %168 = arith.mulf %167, %164 : vector<8x32xf32>
    %169 = arith.addf %83, %168 : vector<8x32xf32>
    %170 = arith.index_cast %arg1 : i32 to index
    %c0_84 = arith.constant 0 : index
    %c0_85 = arith.constant 0 : index
    %171 = vector.load %arg20[%170, %c0_84, %c0_85] : memref<2x8x32xf32, #tpu.memory_space<vmem>>, vector<1x8x32xf32>
    %172 = vector.shape_cast %171 : vector<1x8x32xf32> to vector<8x32xf32>
    %173 = vector.shape_cast %169 : vector<8x32xf32> to vector<1x8x32xf32>
    tpu.vector_store %arg20[%170, %c0_84, %c0_85], %173 {strides = array<i32>} : memref<2x8x32xf32, #tpu.memory_space<vmem>>, vector<1x8x32xf32>,
    %c1_i32 = arith.constant 1 : i32
    %174 = arith.cmpi eq, %arg0, %c1_i32 : i32
    %175 = arith.extui %174 : i1 to i32
    %c0_i32_86 = arith.constant 0 : i32
    %176 = arith.cmpi ne, %175, %c0_i32_86 : i32
    scf.if %176 {
      %c0_87 = arith.constant 0 : index
      %c0_88 = arith.constant 0 : index
      %177 = vector.load %arg18[%c0_87, %c0_88] : memref<1x32xf32, #tpu.memory_space<vmem>>, vector<1x32xf32>
      %c0_89 = arith.constant 0 : index
      %c0_90 = arith.constant 0 : index
      %178 = vector.load %arg19[%c0_89, %c0_90] : memref<1x32xf32, #tpu.memory_space<vmem>>, vector<1x32xf32>
      %cst_91 = arith.constant dense<0.000000e+00> : vector<8xf32>
      %179 = vector.multi_reduction <add>, %169, %cst_91 [1] : vector<8x32xf32> to vector<8xf32>
      %180 = vector.shape_cast %179 : vector<8xf32> to vector<8x1xf32>
      %cst_92 = arith.constant 3.200000e+01 : f32
      %181 = vector.broadcast %cst_92 : f32 to vector<8x1xf32>
      %182 = arith.divf %180, %181 : vector<8x1xf32>
      %183 = vector.broadcast %182 : vector<8x1xf32> to vector<8x32xf32>
      %184 = arith.subf %169, %183 : vector<8x32xf32>
      %185 = arith.mulf %184, %184 : vector<8x32xf32>
      %cst_93 = arith.constant dense<0.000000e+00> : vector<8xf32>
      %186 = vector.multi_reduction <add>, %185, %cst_93 [1] : vector<8x32xf32> to vector<8xf32>
      %187 = vector.shape_cast %186 : vector<8xf32> to vector<8x1xf32>
      %cst_94 = arith.constant 3.200000e+01 : f32
      %188 = vector.broadcast %cst_94 : f32 to vector<8x1xf32>
      %189 = arith.divf %187, %188 : vector<8x1xf32>
      %cst_95 = arith.constant 9.99999997E-7 : f32
      %190 = vector.broadcast %cst_95 : f32 to vector<8x1xf32>
      %191 = arith.addf %189, %190 : vector<8x1xf32>
      %192 = math.rsqrt %191 : vector<8x1xf32>
      %193 = vector.broadcast %192 : vector<8x1xf32> to vector<8x32xf32>
      %194 = arith.mulf %184, %193 : vector<8x32xf32>
      %195 = vector.broadcast %177 : vector<1x32xf32> to vector<8x32xf32>
      %196 = arith.mulf %194, %195 : vector<8x32xf32>
      %197 = vector.broadcast %178 : vector<1x32xf32> to vector<8x32xf32>
      %198 = arith.addf %196, %197 : vector<8x32xf32>
      %199 = arith.index_cast %arg1 : i32 to index
      %c0_96 = arith.constant 0 : index
      %c0_97 = arith.constant 0 : index
      %200 = vector.load %arg20[%199, %c0_96, %c0_97] : memref<2x8x32xf32, #tpu.memory_space<vmem>>, vector<1x8x32xf32>
      %201 = vector.shape_cast %200 : vector<1x8x32xf32> to vector<8x32xf32>
      %202 = vector.shape_cast %198 : vector<8x32xf32> to vector<1x8x32xf32>
      tpu.vector_store %arg20[%199, %c0_96, %c0_97], %202 {strides = array<i32>} : memref<2x8x32xf32, #tpu.memory_space<vmem>>, vector<1x8x32xf32>,
    } else {
    }
    return
  }
  func.func @transform_0(%arg0: i32, %arg1: i32) -> (i32, i32, i32) {
    %c0_i32 = arith.constant 0 : i32
    %c0_i32_0 = arith.constant 0 : i32
    %c0_i32_1 = arith.constant 0 : i32
    %c0_i32_2 = arith.constant 0 : i32
    return %c0_i32, %c0_i32_0, %c0_i32_1 : i32, i32, i32
  }
  func.func @transform_1(%arg0: i32, %arg1: i32) -> (i32, i32, i32) {
    %c0_i32 = arith.constant 0 : i32
    %c0_i32_0 = arith.constant 0 : i32
    %c0_i32_1 = arith.constant 0 : i32
    %c0_i32_2 = arith.constant 0 : i32
    return %c0_i32, %c0_i32_0, %c0_i32_1 : i32, i32, i32
  }
  func.func @transform_2(%arg0: i32, %arg1: i32) -> (i32, i32, i32) {
    %c0_i32 = arith.constant 0 : i32
    %c0_i32_0 = arith.constant 0 : i32
    %c0_i32_1 = arith.constant 0 : i32
    return %arg0, %c0_i32, %c0_i32_0 : i32, i32, i32
  }
  func.func @transform_3(%arg0: i32, %arg1: i32) -> (i32, i32, i32) {
    %c0_i32 = arith.constant 0 : i32
    %c0_i32_0 = arith.constant 0 : i32
    %c0_i32_1 = arith.constant 0 : i32
    return %arg0, %c0_i32, %c0_i32_0 : i32, i32, i32
  }
  func.func @transform_4(%arg0: i32, %arg1: i32) -> (i32, i32, i32, i32) {
    %c0_i32 = arith.constant 0 : i32
    %c0_i32_0 = arith.constant 0 : i32
    %c0_i32_1 = arith.constant 0 : i32
    %c0_i32_2 = arith.constant 0 : i32
    return %arg0, %c0_i32, %c0_i32_0, %c0_i32_1 : i32, i32, i32, i32
  }
  func.func @transform_5(%arg0: i32, %arg1: i32) -> (i32, i32, i32, i32) {
    %c0_i32 = arith.constant 0 : i32
    %c0_i32_0 = arith.constant 0 : i32
    %c0_i32_1 = arith.constant 0 : i32
    %c0_i32_2 = arith.constant 0 : i32
    return %arg0, %c0_i32, %c0_i32_0, %c0_i32_1 : i32, i32, i32, i32
  }
  func.func @transform_6(%arg0: i32, %arg1: i32) -> (i32, i32, i32, i32) {
    %c0_i32 = arith.constant 0 : i32
    %c0_i32_0 = arith.constant 0 : i32
    %c0_i32_1 = arith.constant 0 : i32
    %c0_i32_2 = arith.constant 0 : i32
    return %arg0, %c0_i32, %c0_i32_0, %c0_i32_1 : i32, i32, i32, i32
  }
  func.func @transform_7(%arg0: i32, %arg1: i32) -> (i32, i32, i32) {
    %c0_i32 = arith.constant 0 : i32
    %c0_i32_0 = arith.constant 0 : i32
    %c0_i32_1 = arith.constant 0 : i32
    return %arg0, %c0_i32, %c0_i32_0 : i32, i32, i32
  }
  func.func @transform_8(%arg0: i32, %arg1: i32) -> (i32, i32, i32) {
    %c0_i32 = arith.constant 0 : i32
    %c0_i32_0 = arith.constant 0 : i32
    %c0_i32_1 = arith.constant 0 : i32
    return %arg0, %c0_i32, %c0_i32_0 : i32, i32, i32
  }
  func.func @transform_9(%arg0: i32, %arg1: i32) -> (i32, i32, i32) {
    %c0_i32 = arith.constant 0 : i32
    %c0_i32_0 = arith.constant 0 : i32
    %c0_i32_1 = arith.constant 0 : i32
    return %arg0, %c0_i32, %c0_i32_0 : i32, i32, i32
  }
  func.func @transform_10(%arg0: i32, %arg1: i32) -> (i32, i32, i32) {
    %c0_i32 = arith.constant 0 : i32
    %c0_i32_0 = arith.constant 0 : i32
    %c0_i32_1 = arith.constant 0 : i32
    return %arg0, %c0_i32, %c0_i32_0 : i32, i32, i32
  }
  func.func @transform_11(%arg0: i32, %arg1: i32) -> (i32, i32, i32) {
    %c0_i32 = arith.constant 0 : i32
    %c0_i32_0 = arith.constant 0 : i32
    %c0_i32_1 = arith.constant 0 : i32
    return %arg0, %c0_i32, %c0_i32_0 : i32, i32, i32
  }
  func.func @transform_12(%arg0: i32, %arg1: i32) -> (i32, i32, i32) {
    %c0_i32 = arith.constant 0 : i32
    %c0_i32_0 = arith.constant 0 : i32
    %c0_i32_1 = arith.constant 0 : i32
    return %arg0, %c0_i32, %c0_i32_0 : i32, i32, i32
  }
  func.func @transform_13(%arg0: i32, %arg1: i32) -> (i32, i32, i32) {
    %c0_i32 = arith.constant 0 : i32
    %c0_i32_0 = arith.constant 0 : i32
    %c0_i32_1 = arith.constant 0 : i32
    return %arg0, %c0_i32, %c0_i32_0 : i32, i32, i32
  }
  func.func @transform_14(%arg0: i32, %arg1: i32) -> (i32, i32, i32) {
    %c0_i32 = arith.constant 0 : i32
    %c0_i32_0 = arith.constant 0 : i32
    %c0_i32_1 = arith.constant 0 : i32
    return %arg0, %c0_i32, %c0_i32_0 : i32, i32, i32
  }
  func.func @transform_15(%arg0: i32, %arg1: i32) -> (i32, i32, i32) {
    %c0_i32 = arith.constant 0 : i32
    %c0_i32_0 = arith.constant 0 : i32
    %c0_i32_1 = arith.constant 0 : i32
    return %arg0, %c0_i32, %c0_i32_0 : i32, i32, i32
  }
  func.func @transform_16(%arg0: i32, %arg1: i32) -> (i32, i32) {
    %c0_i32 = arith.constant 0 : i32
    %c0_i32_0 = arith.constant 0 : i32
    %c0_i32_1 = arith.constant 0 : i32
    return %c0_i32, %c0_i32_0 : i32, i32
  }
  func.func @transform_17(%arg0: i32, %arg1: i32) -> (i32, i32) {
    %c0_i32 = arith.constant 0 : i32
    %c0_i32_0 = arith.constant 0 : i32
    %c0_i32_1 = arith.constant 0 : i32
    return %c0_i32, %c0_i32_0 : i32, i32
  }
  func.func @transform_18(%arg0: i32, %arg1: i32) -> (i32, i32, i32) {
    %c0_i32 = arith.constant 0 : i32
    %c0_i32_0 = arith.constant 0 : i32
    %c0_i32_1 = arith.constant 0 : i32
    %c0_i32_2 = arith.constant 0 : i32
    return %c0_i32, %c0_i32_0, %c0_i32_1 : i32, i32, i32
  }
}

</mosaic_0001>

<llo_original>
// kernel: tpu_custom_call.1
$region0: #{tpu_custom_call.1}
  #allocation0 [shape = 'u32[]', space=smem, size = 0x4, offset = 0x4, fixed_abs, tag = 'smem constant byte address 0x4 - core index']
  #allocation1 [shape = 'u32[144,128]{1,0:T(1,128)}', space=vmem, size = 0x12000, scoped, tag = 'internal scratch']
  %s0 = inlined_call_operand.vmem [shape: f32[2,8,32], index: 0, kind: input, shape index: {}]
  %s1 = inlined_call_operand.vmem [shape: f32[1,8,32], index: 1, kind: input, shape index: {}]
  %s2 = inlined_call_operand.vmem [shape: f32[2,1,32], index: 2, kind: input, shape index: {}]
  %s3 = inlined_call_operand.vmem [shape: f32[2,1,32], index: 3, kind: input, shape index: {}]
  %s4 = inlined_call_operand.vmem [shape: bf16[2,12,32,8], index: 4, kind: input, shape index: {}]
  %s5 = inlined_call_operand.vmem [shape: f32[2,12,1,8], index: 5, kind: input, shape index: {}]
  %s6 = inlined_call_operand.vmem [shape: bf16[2,4,8,32], index: 6, kind: input, shape index: {}]
  %s7 = inlined_call_operand.vmem [shape: f32[2,1,32], index: 7, kind: input, shape index: {}]
  %s8 = inlined_call_operand.vmem [shape: f32[2,1,32], index: 8, kind: input, shape index: {}]
  %s9 = inlined_call_operand.vmem [shape: f32[2,1,32], index: 9, kind: input, shape index: {}]
  %s10 = inlined_call_operand.vmem [shape: f32[2,1,32], index: 10, kind: input, shape index: {}]
  %s11 = inlined_call_operand.vmem [shape: bf16[2,32,64], index: 11, kind: input, shape index: {}]
  %s12 = inlined_call_operand.vmem [shape: f32[2,1,64], index: 12, kind: input, shape index: {}]
  %s13 = inlined_call_operand.vmem [shape: bf16[2,64,32], index: 13, kind: input, shape index: {}]
  %s14 = inlined_call_operand.vmem [shape: f32[2,1,32], index: 14, kind: input, shape index: {}]
  %s15 = inlined_call_operand.vmem [shape: f32[2,1,32], index: 15, kind: input, shape index: {}]
  %s16 = inlined_call_operand.vmem [shape: f32[1,32], index: 16, kind: input, shape index: {}]
  %s17 = inlined_call_operand.vmem [shape: f32[1,32], index: 17, kind: input, shape index: {}]
  %s18 = inlined_call_operand.hbm [shape: f32[2,8,32], index: 18, kind: output, shape index: {}]
  %s19 = sld [smem:[#allocation0]]
  $region113: #{tpu_custom_call.1} parent=0
    _
  %s21 = ssub.s32 1, %s19
  %s22 = scalar_select 0, %s21, %s19
  $region1: #{tpu_custom_call.1} parent=0
    #allocation2 [shape = 'u8[8192]{0}', space=vmem, size = 0x2000, scoped, tag = 'output window, operand 0, single buffered']
    #allocation3 [shape = 's32[2]{0}', space=sflag, size = 0x8, scoped, tag = 'scoped memory for tpu_custom_call.1']
    %23 = vsyncpa [#allocation3], 0
    loop: start=0, step=1, limit=6
    $region2: #{tpu_custom_call.1} parent=1 // loop_pre_header
      _
    $region3: #{tpu_custom_call.1} parent=1 // loop_header
      %s25 = sphi 0, %s29
      %p26 = scmp.ge.s32.totalorder %s25, 6
      %s32 = sphi 0, %s44
      %s33 = sphi 0, %s40
      %s34 = sphi 0, %s32
      %s35 = sphi 0, %s33
      %s36 = sphi 0, %s34
      %s37 = sphi 0, %s35
      %s45 = sphi 0, %s45
      %s47 = sphi 0, %s45
      %s48 = sphi 0, %s47
      %s62 = sphi 0, %s48
      %s66 = sphi 0, %s66
      %s68 = sphi 0, %s66
      %s69 = sphi 0, %s68
      %s83 = sphi 0, %s69
      %s89 = sphi 0, %s91
      %s92 = sphi 0, %s89
      %s93 = sphi 0, %s92
      %s109 = sphi 0, %s93
      %s115 = sphi 0, %s117
      %s118 = sphi 0, %s115
      %s119 = sphi 0, %s118
      %s135 = sphi 0, %s119
      %s141 = sphi 0, %s143
      %s144 = sphi 0, %s141
      %s145 = sphi 0, %s144
      %s161 = sphi 0, %s145
      %s167 = sphi 0, %s169
      %s170 = sphi 0, %s167
      %s171 = sphi 0, %s170
      %s187 = sphi 0, %s171
      %s193 = sphi 0, %s195
      %s196 = sphi 0, %s193
      %s197 = sphi 0, %s196
      %s213 = sphi 0, %s197
      %s219 = sphi 0, %s221
      %s222 = sphi 0, %s219
      %s223 = sphi 0, %s222
      %s239 = sphi 0, %s223
      %s245 = sphi 0, %s247
      %s248 = sphi 0, %s245
      %s249 = sphi 0, %s248
      %s265 = sphi 0, %s249
      %s271 = sphi 0, %s273
      %s274 = sphi 0, %s271
      %s275 = sphi 0, %s274
      %s291 = sphi 0, %s275
      %s297 = sphi 0, %s299
      %s300 = sphi 0, %s297
      %s301 = sphi 0, %s300
      %s317 = sphi 0, %s301
      %s323 = sphi 0, %s325
      %s326 = sphi 0, %s323
      %s327 = sphi 0, %s326
      %s343 = sphi 0, %s327
      %s349 = sphi 0, %s351
      %s352 = sphi 0, %s349
      %s353 = sphi 0, %s352
      %s369 = sphi 0, %s353
      %s375 = sphi 0, %s377
      %s378 = sphi 0, %s375
      %s379 = sphi 0, %s378
      %s395 = sphi 0, %s379
      %s401 = sphi 0, %s403
      %s404 = sphi 0, %s401
      %s405 = sphi 0, %s404
      %s421 = sphi 0, %s405
      %s427 = sphi 0, %s429
      %s430 = sphi 0, %s427
      %s431 = sphi 0, %s430
      %s447 = sphi 0, %s431
      %s451 = sphi 0, %s451
      %s453 = sphi 0, %s451
      %s454 = sphi 0, %s453
      %s468 = sphi 0, %s454
      %s472 = sphi 0, %s472
      %s474 = sphi 0, %s472
      %s475 = sphi 0, %s474
      %s489 = sphi 0, %s475
      %s493 = sphi 0, %s493
      %s495 = sphi 0, %s493
      %s496 = sphi 0, %s495
      %s510 = sphi 0, %s496
    $region4: #{tpu_custom_call.1} parent=1 // loop_header_branch
      %28 = sbr.rel (%p26) target = $region8
    $region5: #{tpu_custom_call.1} parent=1 // loop_body
      %s30 = ssub.s32 %s25, 1
      %s31 = ssub.s32 %s25, 2
      %s38 = sadd.s32 1, %s33
      %p39 = scmp.ge.s32.totalorder %s38, 2
      %s40 = scalar_select %p39, 0, %s38
      %s41 = sadd.s32 1, %s32
      %s42 = scalar_select %p39, %s41, %s32
      %p43 = scmp.ge.s32.totalorder %s42, 2
      %s44 = scalar_select %p43, 0, %s42
      %s46 = sadd.s32 %s45, 1
      %p49 = scmp.eq.s32.totalorder %s25, 3
      %p50 = scmp.ne.s32.totalorder %s45, %s47
      %p51 = scmp.eq.s32.totalorder %s25, 0
      %p52 = por %p50, %p51
      %p53 = scmp.ne.s32.totalorder %s45, %s47
      %p54 = scmp.eq.s32.totalorder %s30, 3
      %p55 = por %p53, %p54
      %p56 = scmp.ne.s32.totalorder %s47, %s48
      %p57 = scmp.eq.s32.totalorder %s30, 0
      %p58 = por %p56, %p57
      %p59 = scmp.ne.s32.totalorder %s47, %s48
      %p60 = scmp.eq.s32.totalorder %s31, 3
      %p61 = por %p59, %p60
      %p63 = scmp.ne.s32.totalorder %s48, %s62
      %p64 = scmp.eq.s32.totalorder %s31, 0
      %p65 = por %p63, %p64
      %s67 = sadd.s32 %s66, 1
      %p70 = scmp.eq.s32.totalorder %s25, 3
      %p71 = scmp.ne.s32.totalorder %s66, %s68
      %p72 = scmp.eq.s32.totalorder %s25, 0
      %p73 = por %p71, %p72
      %p74 = scmp.ne.s32.totalorder %s66, %s68
      %p75 = scmp.eq.s32.totalorder %s30, 3
      %p76 = por %p74, %p75
      %p77 = scmp.ne.s32.totalorder %s68, %s69
      %p78 = scmp.eq.s32.totalorder %s30, 0
      %p79 = por %p77, %p78
      %p80 = scmp.ne.s32.totalorder %s68, %s69
      %p81 = scmp.eq.s32.totalorder %s31, 3
      %p82 = por %p80, %p81
      %p84 = scmp.ne.s32.totalorder %s69, %s83
      %p85 = scmp.eq.s32.totalorder %s31, 0
      %p86 = por %p84, %p85
      %s87 = ssub.s32 %s32, %s44
      %p88 = scmp.eq.s32.totalorder %s87, 0
      %s90 = sadd.s32 %s89, 1
      %s91 = scalar_select %p88, %s89, %s90
      %p94 = pneg %p88
      %p95 = scmp.eq.s32.totalorder %s25, 3
      %p96 = por %p94, %p95
      %p97 = scmp.ne.s32.totalorder %s89, %s92
      %p98 = scmp.eq.s32.totalorder %s25, 0
      %p99 = por %p97, %p98
      %p100 = scmp.ne.s32.totalorder %s89, %s92
      %p101 = scmp.eq.s32.totalorder %s30, 3
      %p102 = por %p100, %p101
      %p103 = scmp.ne.s32.totalorder %s92, %s93
      %p104 = scmp.eq.s32.totalorder %s30, 0
      %p105 = por %p103, %p104
      %p106 = scmp.ne.s32.totalorder %s92, %s93
      %p107 = scmp.eq.s32.totalorder %s31, 3
      %p108 = por %p106, %p107
      %p110 = scmp.ne.s32.totalorder %s93, %s109
      %p111 = scmp.eq.s32.totalorder %s31, 0
      %p112 = por %p110, %p111
      %s113 = ssub.s32 %s32, %s44
      %p114 = scmp.eq.s32.totalorder %s113, 0
      %s116 = sadd.s32 %s115, 1
      %s117 = scalar_select %p114, %s115, %s116
      %p120 = pneg %p114
      %p121 = scmp.eq.s32.totalorder %s25, 3
      %p122 = por %p120, %p121
      %p123 = scmp.ne.s32.totalorder %s115, %s118
      %p124 = scmp.eq.s32.totalorder %s25, 0
      %p125 = por %p123, %p124
      %p126 = scmp.ne.s32.totalorder %s115, %s118
      %p127 = scmp.eq.s32.totalorder %s30, 3
      %p128 = por %p126, %p127
      %p129 = scmp.ne.s32.totalorder %s118, %s119
      %p130 = scmp.eq.s32.totalorder %s30, 0
      %p131 = por %p129, %p130
      %p132 = scmp.ne.s32.totalorder %s118, %s119
      %p133 = scmp.eq.s32.totalorder %s31, 3
      %p134 = por %p132, %p133
      %p136 = scmp.ne.s32.totalorder %s119, %s135
      %p137 = scmp.eq.s32.totalorder %s31, 0
      %p138 = por %p136, %p137
      %s139 = ssub.s32 %s32, %s44
      %p140 = scmp.eq.s32.totalorder %s139, 0
      %s142 = sadd.s32 %s141, 1
      %s143 = scalar_select %p140, %s141, %s142
      %p146 = pneg %p140
      %p147 = scmp.eq.s32.totalorder %s25, 3
      %p148 = por %p146, %p147
      %p149 = scmp.ne.s32.totalorder %s141, %s144
      %p150 = scmp.eq.s32.totalorder %s25, 0
      %p151 = por %p149, %p150
      %p152 = scmp.ne.s32.totalorder %s141, %s144
      %p153 = scmp.eq.s32.totalorder %s30, 3
      %p154 = por %p152, %p153
      %p155 = scmp.ne.s32.totalorder %s144, %s145
      %p156 = scmp.eq.s32.totalorder %s30, 0
      %p157 = por %p155, %p156
      %p158 = scmp.ne.s32.totalorder %s144, %s145
      %p159 = scmp.eq.s32.totalorder %s31, 3
      %p160 = por %p158, %p159
      %p162 = scmp.ne.s32.totalorder %s145, %s161
      %p163 = scmp.eq.s32.totalorder %s31, 0
      %p164 = por %p162, %p163
      %s165 = ssub.s32 %s32, %s44
      %p166 = scmp.eq.s32.totalorder %s165, 0
      %s168 = sadd.s32 %s167, 1
      %s169 = scalar_select %p166, %s167, %s168
      %p172 = pneg %p166
      %p173 = scmp.eq.s32.totalorder %s25, 3
      %p174 = por %p172, %p173
      %p175 = scmp.ne.s32.totalorder %s167, %s170
      %p176 = scmp.eq.s32.totalorder %s25, 0
      %p177 = por %p175, %p176
      %p178 = scmp.ne.s32.totalorder %s167, %s170
      %p179 = scmp.eq.s32.totalorder %s30, 3
      %p180 = por %p178, %p179
      %p181 = scmp.ne.s32.totalorder %s170, %s171
      %p182 = scmp.eq.s32.totalorder %s30, 0
      %p183 = por %p181, %p182
      %p184 = scmp.ne.s32.totalorder %s170, %s171
      %p185 = scmp.eq.s32.totalorder %s31, 3
      %p186 = por %p184, %p185
      %p188 = scmp.ne.s32.totalorder %s171, %s187
      %p189 = scmp.eq.s32.totalorder %s31, 0
      %p190 = por %p188, %p189
      %s191 = ssub.s32 %s32, %s44
      %p192 = scmp.eq.s32.totalorder %s191, 0
      %s194 = sadd.s32 %s193, 1
      %s195 = scalar_select %p192, %s193, %s194
      %p198 = pneg %p192
      %p199 = scmp.eq.s32.totalorder %s25, 3
      %p200 = por %p198, %p199
      %p201 = scmp.ne.s32.totalorder %s193, %s196
      %p202 = scmp.eq.s32.totalorder %s25, 0
      %p203 = por %p201, %p202
      %p204 = scmp.ne.s32.totalorder %s193, %s196
      %p205 = scmp.eq.s32.totalorder %s30, 3
      %p206 = por %p204, %p205
      %p207 = scmp.ne.s32.totalorder %s196, %s197
      %p208 = scmp.eq.s32.totalorder %s30, 0
      %p209 = por %p207, %p208
      %p210 = scmp.ne.s32.totalorder %s196, %s197
      %p211 = scmp.eq.s32.totalorder %s31, 3
      %p212 = por %p210, %p211
      %p214 = scmp.ne.s32.totalorder %s197, %s213
      %p215 = scmp.eq.s32.totalorder %s31, 0
      %p216 = por %p214, %p215
      %s217 = ssub.s32 %s32, %s44
      %p218 = scmp.eq.s32.totalorder %s217, 0
      %s220 = sadd.s32 %s219, 1
      %s221 = scalar_select %p218, %s219, %s220
      %p224 = pneg %p218
      %p225 = scmp.eq.s32.totalorder %s25, 3
      %p226 = por %p224, %p225
      %p227 = scmp.ne.s32.totalorder %s219, %s222
      %p228 = scmp.eq.s32.totalorder %s25, 0
      %p229 = por %p227, %p228
      %p230 = scmp.ne.s32.totalorder %s219, %s222
      %p231 = scmp.eq.s32.totalorder %s30, 3
      %p232 = por %p230, %p231
      %p233 = scmp.ne.s32.totalorder %s222, %s223
      %p234 = scmp.eq.s32.totalorder %s30, 0
      %p235 = por %p233, %p234
      %p236 = scmp.ne.s32.totalorder %s222, %s223
      %p237 = scmp.eq.s32.totalorder %s31, 3
      %p238 = por %p236, %p237
      %p240 = scmp.ne.s32.totalorder %s223, %s239
      %p241 = scmp.eq.s32.totalorder %s31, 0
      %p242 = por %p240, %p241
      %s243 = ssub.s32 %s32, %s44
      %p244 = scmp.eq.s32.totalorder %s243, 0
      %s246 = sadd.s32 %s245, 1
      %s247 = scalar_select %p244, %s245, %s246
      %p250 = pneg %p244
      %p251 = scmp.eq.s32.totalorder %s25, 3
      %p252 = por %p250, %p251
      %p253 = scmp.ne.s32.totalorder %s245, %s248
      %p254 = scmp.eq.s32.totalorder %s25, 0
      %p255 = por %p253, %p254
      %p256 = scmp.ne.s32.totalorder %s245, %s248
      %p257 = scmp.eq.s32.totalorder %s30, 3
      %p258 = por %p256, %p257
      %p259 = scmp.ne.s32.totalorder %s248, %s249
      %p260 = scmp.eq.s32.totalorder %s30, 0
      %p261 = por %p259, %p260
      %p262 = scmp.ne.s32.totalorder %s248, %s249
      %p263 = scmp.eq.s32.totalorder %s31, 3
      %p264 = por %p262, %p263
      %p266 = scmp.ne.s32.totalorder %s249, %s265
      %p267 = scmp.eq.s32.totalorder %s31, 0
      %p268 = por %p266, %p267
      %s269 = ssub.s32 %s32, %s44
      %p270 = scmp.eq.s32.totalorder %s269, 0
      %s272 = sadd.s32 %s271, 1
      %s273 = scalar_select %p270, %s271, %s272
      %p276 = pneg %p270
      %p277 = scmp.eq.s32.totalorder %s25, 3
      %p278 = por %p276, %p277
      %p279 = scmp.ne.s32.totalorder %s271, %s274
      %p280 = scmp.eq.s32.totalorder %s25, 0
      %p281 = por %p279, %p280
      %p282 = scmp.ne.s32.totalorder %s271, %s274
      %p283 = scmp.eq.s32.totalorder %s30, 3
      %p284 = por %p282, %p283
      %p285 = scmp.ne.s32.totalorder %s274, %s275
      %p286 = scmp.eq.s32.totalorder %s30, 0
      %p287 = por %p285, %p286
      %p288 = scmp.ne.s32.totalorder %s274, %s275
      %p289 = scmp.eq.s32.totalorder %s31, 3
      %p290 = por %p288, %p289
      %p292 = scmp.ne.s32.totalorder %s275, %s291
      %p293 = scmp.eq.s32.totalorder %s31, 0
      %p294 = por %p292, %p293
      %s295 = ssub.s32 %s32, %s44
      %p296 = scmp.eq.s32.totalorder %s295, 0
      %s298 = sadd.s32 %s297, 1
      %s299 = scalar_select %p296, %s297, %s298
      %p302 = pneg %p296
      %p303 = scmp.eq.s32.totalorder %s25, 3
      %p304 = por %p302, %p303
      %p305 = scmp.ne.s32.totalorder %s297, %s300
      %p306 = scmp.eq.s32.totalorder %s25, 0
      %p307 = por %p305, %p306
      %p308 = scmp.ne.s32.totalorder %s297, %s300
      %p309 = scmp.eq.s32.totalorder %s30, 3
      %p310 = por %p308, %p309
      %p311 = scmp.ne.s32.totalorder %s300, %s301
      %p312 = scmp.eq.s32.totalorder %s30, 0
      %p313 = por %p311, %p312
      %p314 = scmp.ne.s32.totalorder %s300, %s301
      %p315 = scmp.eq.s32.totalorder %s31, 3
      %p316 = por %p314, %p315
      %p318 = scmp.ne.s32.totalorder %s301, %s317
      %p319 = scmp.eq.s32.totalorder %s31, 0
      %p320 = por %p318, %p319
      %s321 = ssub.s32 %s32, %s44
      %p322 = scmp.eq.s32.totalorder %s321, 0
      %s324 = sadd.s32 %s323, 1
      %s325 = scalar_select %p322, %s323, %s324
      %p328 = pneg %p322
      %p329 = scmp.eq.s32.totalorder %s25, 3
      %p330 = por %p328, %p329
      %p331 = scmp.ne.s32.totalorder %s323, %s326
      %p332 = scmp.eq.s32.totalorder %s25, 0
      %p333 = por %p331, %p332
      %p334 = scmp.ne.s32.totalorder %s323, %s326
      %p335 = scmp.eq.s32.totalorder %s30, 3
      %p336 = por %p334, %p335
      %p337 = scmp.ne.s32.totalorder %s326, %s327
      %p338 = scmp.eq.s32.totalorder %s30, 0
      %p339 = por %p337, %p338
      %p340 = scmp.ne.s32.totalorder %s326, %s327
      %p341 = scmp.eq.s32.totalorder %s31, 3
      %p342 = por %p340, %p341
      %p344 = scmp.ne.s32.totalorder %s327, %s343
      %p345 = scmp.eq.s32.totalorder %s31, 0
      %p346 = por %p344, %p345
      %s347 = ssub.s32 %s32, %s44
      %p348 = scmp.eq.s32.totalorder %s347, 0
      %s350 = sadd.s32 %s349, 1
      %s351 = scalar_select %p348, %s349, %s350
      %p354 = pneg %p348
      %p355 = scmp.eq.s32.totalorder %s25, 3
      %p356 = por %p354, %p355
      %p357 = scmp.ne.s32.totalorder %s349, %s352
      %p358 = scmp.eq.s32.totalorder %s25, 0
      %p359 = por %p357, %p358
      %p360 = scmp.ne.s32.totalorder %s349, %s352
      %p361 = scmp.eq.s32.totalorder %s30, 3
      %p362 = por %p360, %p361
      %p363 = scmp.ne.s32.totalorder %s352, %s353
      %p364 = scmp.eq.s32.totalorder %s30, 0
      %p365 = por %p363, %p364
      %p366 = scmp.ne.s32.totalorder %s352, %s353
      %p367 = scmp.eq.s32.totalorder %s31, 3
      %p368 = por %p366, %p367
      %p370 = scmp.ne.s32.totalorder %s353, %s369
      %p371 = scmp.eq.s32.totalorder %s31, 0
      %p372 = por %p370, %p371
      %s373 = ssub.s32 %s32, %s44
      %p374 = scmp.eq.s32.totalorder %s373, 0
      %s376 = sadd.s32 %s375, 1
      %s377 = scalar_select %p374, %s375, %s376
      %p380 = pneg %p374
      %p381 = scmp.eq.s32.totalorder %s25, 3
      %p382 = por %p380, %p381
      %p383 = scmp.ne.s32.totalorder %s375, %s378
      %p384 = scmp.eq.s32.totalorder %s25, 0
      %p385 = por %p383, %p384
      %p386 = scmp.ne.s32.totalorder %s375, %s378
      %p387 = scmp.eq.s32.totalorder %s30, 3
      %p388 = por %p386, %p387
      %p389 = scmp.ne.s32.totalorder %s378, %s379
      %p390 = scmp.eq.s32.totalorder %s30, 0
      %p391 = por %p389, %p390
      %p392 = scmp.ne.s32.totalorder %s378, %s379
      %p393 = scmp.eq.s32.totalorder %s31, 3
      %p394 = por %p392, %p393
      %p396 = scmp.ne.s32.totalorder %s379, %s395
      %p397 = scmp.eq.s32.totalorder %s31, 0
      %p398 = por %p396, %p397
      %s399 = ssub.s32 %s32, %s44
      %p400 = scmp.eq.s32.totalorder %s399, 0
      %s402 = sadd.s32 %s401, 1
      %s403 = scalar_select %p400, %s401, %s402
      %p406 = pneg %p400
      %p407 = scmp.eq.s32.totalorder %s25, 3
      %p408 = por %p406, %p407
      %p409 = scmp.ne.s32.totalorder %s401, %s404
      %p410 = scmp.eq.s32.totalorder %s25, 0
      %p411 = por %p409, %p410
      %p412 = scmp.ne.s32.totalorder %s401, %s404
      %p413 = scmp.eq.s32.totalorder %s30, 3
      %p414 = por %p412, %p413
      %p415 = scmp.ne.s32.totalorder %s404, %s405
      %p416 = scmp.eq.s32.totalorder %s30, 0
      %p417 = por %p415, %p416
      %p418 = scmp.ne.s32.totalorder %s404, %s405
      %p419 = scmp.eq.s32.totalorder %s31, 3
      %p420 = por %p418, %p419
      %p422 = scmp.ne.s32.totalorder %s405, %s421
      %p423 = scmp.eq.s32.totalorder %s31, 0
      %p424 = por %p422, %p423
      %s425 = ssub.s32 %s32, %s44
      %p426 = scmp.eq.s32.totalorder %s425, 0
      %s428 = sadd.s32 %s427, 1
      %s429 = scalar_select %p426, %s427, %s428
      %p432 = pneg %p426
      %p433 = scmp.eq.s32.totalorder %s25, 3
      %p434 = por %p432, %p433
      %p435 = scmp.ne.s32.totalorder %s427, %s430
      %p436 = scmp.eq.s32.totalorder %s25, 0
      %p437 = por %p435, %p436
      %p438 = scmp.ne.s32.totalorder %s427, %s430
      %p439 = scmp.eq.s32.totalorder %s30, 3
      %p440 = por %p438, %p439
      %p441 = scmp.ne.s32.totalorder %s430, %s431
      %p442 = scmp.eq.s32.totalorder %s30, 0
      %p443 = por %p441, %p442
      %p444 = scmp.ne.s32.totalorder %s430, %s431
      %p445 = scmp.eq.s32.totalorder %s31, 3
      %p446 = por %p444, %p445
      %p448 = scmp.ne.s32.totalorder %s431, %s447
      %p449 = scmp.eq.s32.totalorder %s31, 0
      %p450 = por %p448, %p449
      %s452 = sadd.s32 %s451, 1
      %p455 = scmp.eq.s32.totalorder %s25, 3
      %p456 = scmp.ne.s32.totalorder %s451, %s453
      %p457 = scmp.eq.s32.totalorder %s25, 0
      %p458 = por %p456, %p457
      %p459 = scmp.ne.s32.totalorder %s451, %s453
      %p460 = scmp.eq.s32.totalorder %s30, 3
      %p461 = por %p459, %p460
      %p462 = scmp.ne.s32.totalorder %s453, %s454
      %p463 = scmp.eq.s32.totalorder %s30, 0
      %p464 = por %p462, %p463
      %p465 = scmp.ne.s32.totalorder %s453, %s454
      %p466 = scmp.eq.s32.totalorder %s31, 3
      %p467 = por %p465, %p466
      %p469 = scmp.ne.s32.totalorder %s454, %s468
      %p470 = scmp.eq.s32.totalorder %s31, 0
      %p471 = por %p469, %p470
      %s473 = sadd.s32 %s472, 1
      %p476 = scmp.eq.s32.totalorder %s25, 3
      %p477 = scmp.ne.s32.totalorder %s472, %s474
      %p478 = scmp.eq.s32.totalorder %s25, 0
      %p479 = por %p477, %p478
      %p480 = scmp.ne.s32.totalorder %s472, %s474
      %p481 = scmp.eq.s32.totalorder %s30, 3
      %p482 = por %p480, %p481
      %p483 = scmp.ne.s32.totalorder %s474, %s475
      %p484 = scmp.eq.s32.totalorder %s30, 0
      %p485 = por %p483, %p484
      %p486 = scmp.ne.s32.totalorder %s474, %s475
      %p487 = scmp.eq.s32.totalorder %s31, 3
      %p488 = por %p486, %p487
      %p490 = scmp.ne.s32.totalorder %s475, %s489
      %p491 = scmp.eq.s32.totalorder %s31, 0
      %p492 = por %p490, %p491
      %s494 = sadd.s32 %s493, 1
      %p497 = scmp.eq.s32.totalorder %s25, 3
      %p498 = scmp.ne.s32.totalorder %s493, %s495
      %p499 = scmp.eq.s32.totalorder %s25, 0
      %p500 = por %p498, %p499
      %p501 = scmp.ne.s32.totalorder %s493, %s495
      %p502 = scmp.eq.s32.totalorder %s30, 3
      %p503 = por %p501, %p502
      %p504 = scmp.ne.s32.totalorder %s495, %s496
      %p505 = scmp.eq.s32.totalorder %s30, 0
      %p506 = por %p504, %p505
      %p507 = scmp.ne.s32.totalorder %s495, %s496
      %p508 = scmp.eq.s32.totalorder %s31, 3
      %p509 = por %p507, %p508
      %p511 = scmp.ne.s32.totalorder %s496, %s510
      %p512 = scmp.eq.s32.totalorder %s31, 0
      %p513 = por %p511, %p512
      %p514 = scmp.le.s32.totalorder 1, %s25
      %p515 = scmp.lt.s32.totalorder %s25, 5
      %p516 = pnand %p514, %p515
      %p517 = pneg %p516
      // Predicated region
      $region9: #{tpu_custom_call.1} parent=5 // pred_check
        _
      $region10: #{tpu_custom_call.1} parent=5 // pred_check_branch
        %519 = sbr.rel (%p516) target = $region12
      $region11: #{tpu_custom_call.1} parent=5 // pred_region
        %s520 = ssub.s32 %s25, 1
        // Predicated region
        $region13: #{tpu_custom_call.1} parent=11 // pred_check
          %p521 = pneg %p58
        $region14: #{tpu_custom_call.1} parent=11 // pred_check_branch
          %523 = sbr.rel (%p521) target = $region16
        $region15: #{tpu_custom_call.1} parent=11 // pred_region
          _
        $region16: #{tpu_custom_call.1} parent=11 // pred_fallthru
          _
        // Predicated region
        $region17: #{tpu_custom_call.1} parent=11 // pred_check
          %p524 = pneg %p79
        $region18: #{tpu_custom_call.1} parent=11 // pred_check_branch
          %526 = sbr.rel (%p524) target = $region20
        $region19: #{tpu_custom_call.1} parent=11 // pred_region
          _
        $region20: #{tpu_custom_call.1} parent=11 // pred_fallthru
          _
        // Predicated region
        $region21: #{tpu_custom_call.1} parent=11 // pred_check
          %p527 = pneg %p464
        $region22: #{tpu_custom_call.1} parent=11 // pred_check_branch
          %529 = sbr.rel (%p527) target = $region24
        $region23: #{tpu_custom_call.1} parent=11 // pred_region
          _
        $region24: #{tpu_custom_call.1} parent=11 // pred_fallthru
          _
        // Predicated region
        $region25: #{tpu_custom_call.1} parent=11 // pred_check
          %p530 = pneg %p485
        $region26: #{tpu_custom_call.1} parent=11 // pred_check_branch
          %532 = sbr.rel (%p530) target = $region28
        $region27: #{tpu_custom_call.1} parent=11 // pred_region
          _
        $region28: #{tpu_custom_call.1} parent=11 // pred_fallthru
          _
      $region12: #{tpu_custom_call.1} parent=5 // pred_fallthru
        _
      %p533 = scmp.lt.s32.totalorder %s25, 4
      // Predicated region
      $region29: #{tpu_custom_call.1} parent=5 // pred_check
        %p534 = pneg %p533
      $region30: #{tpu_custom_call.1} parent=5 // pred_check_branch
        %536 = sbr.rel (%p534) target = $region32
      $region31: #{tpu_custom_call.1} parent=5 // pred_region
        // Predicated region
        $region33: #{tpu_custom_call.1} parent=31 // pred_check
          %p537 = pneg %p99
        $region34: #{tpu_custom_call.1} parent=31 // pred_check_branch
          %539 = sbr.rel (%p537) target = $region36
        $region35: #{tpu_custom_call.1} parent=31 // pred_region
          %p540 = scmp.lt.s32.totalorder %s32, 1
          %s541 = scalar_select %p540, %s32, 1
          %s542 = scalar_lea.vmem %s2, %s541
        $region36: #{tpu_custom_call.1} parent=31 // pred_fallthru
          _
        // Predicated region
        $region37: #{tpu_custom_call.1} parent=31 // pred_check
          %p543 = pneg %p125
        $region38: #{tpu_custom_call.1} parent=31 // pred_check_branch
          %545 = sbr.rel (%p543) target = $region40
        $region39: #{tpu_custom_call.1} parent=31 // pred_region
          %p546 = scmp.lt.s32.totalorder %s32, 1
          %s547 = scalar_select %p546, %s32, 1
          %s548 = scalar_lea.vmem %s3, %s547
        $region40: #{tpu_custom_call.1} parent=31 // pred_fallthru
          _
        // Predicated region
        $region41: #{tpu_custom_call.1} parent=31 // pred_check
          %p549 = pneg %p151
        $region42: #{tpu_custom_call.1} parent=31 // pred_check_branch
          %551 = sbr.rel (%p549) target = $region44
        $region43: #{tpu_custom_call.1} parent=31 // pred_region
          %p552 = scmp.lt.s32.totalorder %s32, 1
          %s553 = scalar_select %p552, %s32, 1
          %s554 = smul.addr %s553, 48
          %s555 = smul.addr %s554, 4
          %s556 = scalar_lea.vmem %s4, %s555
        $region44: #{tpu_custom_call.1} parent=31 // pred_fallthru
          _
        // Predicated region
        $region45: #{tpu_custom_call.1} parent=31 // pred_check
          %p557 = pneg %p177
        $region46: #{tpu_custom_call.1} parent=31 // pred_check_branch
          %559 = sbr.rel (%p557) target = $region48
        $region47: #{tpu_custom_call.1} parent=31 // pred_region
          %p560 = scmp.lt.s32.totalorder %s32, 1
          %s561 = scalar_select %p560, %s32, 1
          %s562 = smul.addr %s561, 12
          %s563 = scalar_lea.vmem %s5, %s562
        $region48: #{tpu_custom_call.1} parent=31 // pred_fallthru
          _
        // Predicated region
        $region49: #{tpu_custom_call.1} parent=31 // pred_check
          %p564 = pneg %p203
        $region50: #{tpu_custom_call.1} parent=31 // pred_check_branch
          %566 = sbr.rel (%p564) target = $region52
        $region51: #{tpu_custom_call.1} parent=31 // pred_region
          %p567 = scmp.lt.s32.totalorder %s32, 1
          %s568 = scalar_select %p567, %s32, 1
          %s569 = smul.addr %s568, 4
          %s570 = smul.addr %s569, 4
          %s571 = scalar_lea.vmem %s6, %s570
        $region52: #{tpu_custom_call.1} parent=31 // pred_fallthru
          _
        // Predicated region
        $region53: #{tpu_custom_call.1} parent=31 // pred_check
          %p572 = pneg %p229
        $region54: #{tpu_custom_call.1} parent=31 // pred_check_branch
          %574 = sbr.rel (%p572) target = $region56
        $region55: #{tpu_custom_call.1} parent=31 // pred_region
          %p575 = scmp.lt.s32.totalorder %s32, 1
          %s576 = scalar_select %p575, %s32, 1
          %s577 = scalar_lea.vmem %s7, %s576
        $region56: #{tpu_custom_call.1} parent=31 // pred_fallthru
          _
        // Predicated region
        $region57: #{tpu_custom_call.1} parent=31 // pred_check
          %p578 = pneg %p255
        $region58: #{tpu_custom_call.1} parent=31 // pred_check_branch
          %580 = sbr.rel (%p578) target = $region60
        $region59: #{tpu_custom_call.1} parent=31 // pred_region
          %p581 = scmp.lt.s32.totalorder %s32, 1
          %s582 = scalar_select %p581, %s32, 1
          %s583 = scalar_lea.vmem %s8, %s582
        $region60: #{tpu_custom_call.1} parent=31 // pred_fallthru
          _
        // Predicated region
        $region61: #{tpu_custom_call.1} parent=31 // pred_check
          %p584 = pneg %p281
        $region62: #{tpu_custom_call.1} parent=31 // pred_check_branch
          %586 = sbr.rel (%p584) target = $region64
        $region63: #{tpu_custom_call.1} parent=31 // pred_region
          %p587 = scmp.lt.s32.totalorder %s32, 1
          %s588 = scalar_select %p587, %s32, 1
          %s589 = scalar_lea.vmem %s9, %s588
        $region64: #{tpu_custom_call.1} parent=31 // pred_fallthru
          _
        // Predicated region
        $region65: #{tpu_custom_call.1} parent=31 // pred_check
          %p590 = pneg %p307
        $region66: #{tpu_custom_call.1} parent=31 // pred_check_branch
          %592 = sbr.rel (%p590) target = $region68
        $region67: #{tpu_custom_call.1} parent=31 // pred_region
          %p593 = scmp.lt.s32.totalorder %s32, 1
          %s594 = scalar_select %p593, %s32, 1
          %s595 = scalar_lea.vmem %s10, %s594
        $region68: #{tpu_custom_call.1} parent=31 // pred_fallthru
          _
        // Predicated region
        $region69: #{tpu_custom_call.1} parent=31 // pred_check
          %p596 = pneg %p333
        $region70: #{tpu_custom_call.1} parent=31 // pred_check_branch
          %598 = sbr.rel (%p596) target = $region72
        $region71: #{tpu_custom_call.1} parent=31 // pred_region
          %p599 = scmp.lt.s32.totalorder %s32, 1
          %s600 = scalar_select %p599, %s32, 1
          %s601 = smul.addr %s600, 4
          %s602 = smul.addr %s601, 4
          %s603 = scalar_lea.vmem %s11, %s602
        $region72: #{tpu_custom_call.1} parent=31 // pred_fallthru
          _
        // Predicated region
        $region73: #{tpu_custom_call.1} parent=31 // pred_check
          %p604 = pneg %p359
        $region74: #{tpu_custom_call.1} parent=31 // pred_check_branch
          %606 = sbr.rel (%p604) target = $region76
        $region75: #{tpu_custom_call.1} parent=31 // pred_region
          %p607 = scmp.lt.s32.totalorder %s32, 1
          %s608 = scalar_select %p607, %s32, 1
          %s609 = scalar_lea.vmem %s12, %s608
        $region76: #{tpu_custom_call.1} parent=31 // pred_fallthru
          _
        // Predicated region
        $region77: #{tpu_custom_call.1} parent=31 // pred_check
          %p610 = pneg %p385
        $region78: #{tpu_custom_call.1} parent=31 // pred_check_branch
          %612 = sbr.rel (%p610) target = $region80
        $region79: #{tpu_custom_call.1} parent=31 // pred_region
          %p613 = scmp.lt.s32.totalorder %s32, 1
          %s614 = scalar_select %p613, %s32, 1
          %s615 = smul.addr %s614, 8
          %s616 = smul.addr %s615, 4
          %s617 = scalar_lea.vmem %s13, %s616
        $region80: #{tpu_custom_call.1} parent=31 // pred_fallthru
          _
        // Predicated region
        $region81: #{tpu_custom_call.1} parent=31 // pred_check
          %p618 = pneg %p411
        $region82: #{tpu_custom_call.1} parent=31 // pred_check_branch
          %620 = sbr.rel (%p618) target = $region84
        $region83: #{tpu_custom_call.1} parent=31 // pred_region
          %p621 = scmp.lt.s32.totalorder %s32, 1
          %s622 = scalar_select %p621, %s32, 1
          %s623 = scalar_lea.vmem %s14, %s622
        $region84: #{tpu_custom_call.1} parent=31 // pred_fallthru
          _
        // Predicated region
        $region85: #{tpu_custom_call.1} parent=31 // pred_check
          %p624 = pneg %p437
        $region86: #{tpu_custom_call.1} parent=31 // pred_check_branch
          %626 = sbr.rel (%p624) target = $region88
        $region87: #{tpu_custom_call.1} parent=31 // pred_region
          %p627 = scmp.lt.s32.totalorder %s32, 1
          %s628 = scalar_select %p627, %s32, 1
          %s629 = scalar_lea.vmem %s15, %s628
        $region88: #{tpu_custom_call.1} parent=31 // pred_fallthru
          _
      $region32: #{tpu_custom_call.1} parent=5 // pred_fallthru
        _
      %p630 = scmp.le.s32.totalorder 1, %s25
      %p631 = scmp.lt.s32.totalorder %s25, 5
      %p632 = pnand %p630, %p631
      %p633 = pneg %p632
      // Predicated region
      $region89: #{tpu_custom_call.1} parent=5 // pred_check
        _
      $region90: #{tpu_custom_call.1} parent=5 // pred_check_branch
        %635 = sbr.rel (%p632) target = $region92
      $region91: #{tpu_custom_call.1} parent=5 // pred_region
        %s636 = ssub.s32 %s25, 1
        %p637 = pneg %p58
        %p638 = pneg %p55
        %p639 = pneg %p79
        %p640 = pneg %p76
        %p641 = scmp.lt.s32.totalorder %s34, 1
        %s642 = scalar_select %p641, %s34, 1
        %s643 = scalar_lea.vmem %s2, %s642
        %p644 = pneg %p105
        %p645 = pneg %p102
        %p646 = scmp.lt.s32.totalorder %s34, 1
        %s647 = scalar_select %p646, %s34, 1
        %s648 = scalar_lea.vmem %s3, %s647
        %p649 = pneg %p131
        %p650 = pneg %p128
        %p651 = scmp.lt.s32.totalorder %s34, 1
        %s652 = scalar_select %p651, %s34, 1
        %s653 = smul.addr %s652, 48
        %s654 = smul.addr %s653, 4
        %s655 = scalar_lea.vmem %s4, %s654
        %p656 = pneg %p157
        %p657 = pneg %p154
        %p658 = scmp.lt.s32.totalorder %s34, 1
        %s659 = scalar_select %p658, %s34, 1
        %s660 = smul.addr %s659, 12
        %s661 = scalar_lea.vmem %s5, %s660
        %p662 = pneg %p183
        %p663 = pneg %p180
        %p664 = scmp.lt.s32.totalorder %s34, 1
        %s665 = scalar_select %p664, %s34, 1
        %s666 = smul.addr %s665, 4
        %s667 = smul.addr %s666, 4
        %s668 = scalar_lea.vmem %s6, %s667
        %p669 = pneg %p209
        %p670 = pneg %p206
        %p671 = scmp.lt.s32.totalorder %s34, 1
        %s672 = scalar_select %p671, %s34, 1
        %s673 = scalar_lea.vmem %s7, %s672
        %p674 = pneg %p235
        %p675 = pneg %p232
        %p676 = scmp.lt.s32.totalorder %s34, 1
        %s677 = scalar_select %p676, %s34, 1
        %s678 = scalar_lea.vmem %s8, %s677
        %p679 = pneg %p261
        %p680 = pneg %p258
        %p681 = scmp.lt.s32.totalorder %s34, 1
        %s682 = scalar_select %p681, %s34, 1
        %s683 = scalar_lea.vmem %s9, %s682
        %p684 = pneg %p287
        %p685 = pneg %p284
        %p686 = scmp.lt.s32.totalorder %s34, 1
        %s687 = scalar_select %p686, %s34, 1
        %s688 = scalar_lea.vmem %s10, %s687
        %p689 = pneg %p313
        %p690 = pneg %p310
        %p691 = scmp.lt.s32.totalorder %s34, 1
        %s692 = scalar_select %p691, %s34, 1
        %s693 = smul.addr %s692, 4
        %s694 = smul.addr %s693, 4
        %s695 = scalar_lea.vmem %s11, %s694
        %p696 = pneg %p339
        %p697 = pneg %p336
        %p698 = scmp.lt.s32.totalorder %s34, 1
        %s699 = scalar_select %p698, %s34, 1
        %s700 = scalar_lea.vmem %s12, %s699
        %p701 = pneg %p365
        %p702 = pneg %p362
        %p703 = scmp.lt.s32.totalorder %s34, 1
        %s704 = scalar_select %p703, %s34, 1
        %s705 = smul.addr %s704, 8
        %s706 = smul.addr %s705, 4
        %s707 = scalar_lea.vmem %s13, %s706
        %p708 = pneg %p391
        %p709 = pneg %p388
        %p710 = scmp.lt.s32.totalorder %s34, 1
        %s711 = scalar_select %p710, %s34, 1
        %s712 = scalar_lea.vmem %s14, %s711
        %p713 = pneg %p417
        %p714 = pneg %p414
        %p715 = scmp.lt.s32.totalorder %s34, 1
        %s716 = scalar_select %p715, %s34, 1
        %s717 = scalar_lea.vmem %s15, %s716
        %p718 = pneg %p443
        %p719 = pneg %p440
        %p720 = pneg %p464
        %p721 = pneg %p461
        %p722 = pneg %p485
        %p723 = pneg %p482
        %p724 = pneg %p506
        %p725 = pneg %p503
        %p726 = scmp.lt.s32.totalorder %s34, 1
        %s727 = scalar_select %p726, %s34, 1
        %s728 = scalar_lea.vmem %s2, %s727
        %p729 = scmp.lt.s32.totalorder %s34, 1
        %s730 = scalar_select %p729, %s34, 1
        %s731 = scalar_lea.vmem %s3, %s730
        %p732 = scmp.lt.s32.totalorder %s34, 1
        %s733 = scalar_select %p732, %s34, 1
        %s734 = smul.addr %s733, 48
        %s735 = smul.addr %s734, 4
        %s736 = scalar_lea.vmem %s4, %s735
        %p737 = scmp.lt.s32.totalorder %s34, 1
        %s738 = scalar_select %p737, %s34, 1
        %s739 = smul.addr %s738, 12
        %s740 = scalar_lea.vmem %s5, %s739
        %p741 = scmp.lt.s32.totalorder %s34, 1
        %s742 = scalar_select %p741, %s34, 1
        %s743 = smul.addr %s742, 4
        %s744 = smul.addr %s743, 4
        %s745 = scalar_lea.vmem %s6, %s744
        %p746 = scmp.lt.s32.totalorder %s34, 1
        %s747 = scalar_select %p746, %s34, 1
        %s748 = scalar_lea.vmem %s7, %s747
        %p749 = scmp.lt.s32.totalorder %s34, 1
        %s750 = scalar_select %p749, %s34, 1
        %s751 = scalar_lea.vmem %s8, %s750
        %p752 = scmp.lt.s32.totalorder %s34, 1
        %s753 = scalar_select %p752, %s34, 1
        %s754 = scalar_lea.vmem %s9, %s753
        %p755 = scmp.lt.s32.totalorder %s34, 1
        %s756 = scalar_select %p755, %s34, 1
        %s757 = scalar_lea.vmem %s10, %s756
        %p758 = scmp.lt.s32.totalorder %s34, 1
        %s759 = scalar_select %p758, %s34, 1
        %s760 = smul.addr %s759, 4
        %s761 = smul.addr %s760, 4
        %s762 = scalar_lea.vmem %s11, %s761
        %p763 = scmp.lt.s32.totalorder %s34, 1
        %s764 = scalar_select %p763, %s34, 1
        %s765 = scalar_lea.vmem %s12, %s764
        %p766 = scmp.lt.s32.totalorder %s34, 1
        %s767 = scalar_select %p766, %s34, 1
        %s768 = smul.addr %s767, 8
        %s769 = smul.addr %s768, 4
        %s770 = scalar_lea.vmem %s13, %s769
        %p771 = scmp.lt.s32.totalorder %s34, 1
        %s772 = scalar_select %p771, %s34, 1
        %s773 = scalar_lea.vmem %s14, %s772
        %p774 = scmp.lt.s32.totalorder %s34, 1
        %s775 = scalar_select %p774, %s34, 1
        %s776 = scalar_lea.vmem %s15, %s775
        %p778 = scmp.eq.s32.totalorder %s34, 0
        // Predicated region
        $region93: #{tpu_custom_call.1} parent=91 // pred_check
          %p779 = pneg %p778
        $region94: #{tpu_custom_call.1} parent=91 // pred_check_branch
          %781 = sbr.rel (%p779) target = $region96
        $region95: #{tpu_custom_call.1} parent=91 // pred_region
          %s782 = smul.u32 %s35, 8
          %s783 = scalar_lea.vmem %s0, %s782
          %v784 = vld [vmem:[%s783] sm:$0xff]
          %v785 = vld [vmem:[%s1] sm:$0xff]
          %v786 = vadd.f32 %v784, %v785
          %s787 = scalar_lea.vmem [#allocation2], %s782
          %vm788 = vcmask 261120
          %789 = vst.msk [vmem:[%s787] sm:$0xff] %vm788, %v786
        $region96: #{tpu_custom_call.1} parent=91 // pred_fallthru
          _
        %s790 = smul.u32 %s35, 8
        %s791 = scalar_lea.vmem [#allocation2], %s790
        %v792 = vld [vmem:[%s791] sm:$0xff]
        %v793 = vld [vmem:[%s728] sm:$0x1]
        %v794 = vld [vmem:[%s731] sm:$0x1]
        %vm795 = vcmask 261120
        %v796 = vsel %vm795, %v792, 0.0
        %797 = vadd.xlane.f32.xlu0 %v796
        %v798 = vpop.xlane.xlu0 %797
        %v799 = vrcp.pop 32.0
        %v800 = vmul.f32 %v798, %v799
        %v801 = vsub.f32 %v792, %v800
        %v802 = vmul.f32 %v801, %v801
        %v803 = vsel %vm795, %v802, 0.0
        %804 = vadd.xlane.f32.xlu0 %v803
        %v805 = vpop.xlane.xlu0 %804
        %v806 = vmul.f32 %v805, %v799
        %v807 = vadd.f32 %v806, 1e-06
        %v808 = vrsqrt.pop %v807
        %v809 = vmul.f32 %v801, %v808
        %v811 = vlaneseq
        %v812 = vshrl.u32 %v811, 7
        %v813 = vsub.s32 0, %v812
        %v814 = vrot.slane %v793, %v813
        %v816 = vmul.f32 %v809, %v814
        %v818 = vlaneseq
        %v819 = vshrl.u32 %v818, 7
        %v820 = vsub.s32 0, %v819
        %v821 = vrot.slane %v794, %v820
        %v823 = vadd.f32 %v816, %v821
        %v824 = vpack.c.bf16 %v823, %v823
        %v825 = vld [vmem:[%s736] sm:$0xf]
        %v826 = vld [vmem:[%s736 + $0x4] sm:$0xf]
        %v827 = vld [vmem:[%s736 + $0x8] sm:$0xf]
        %v828 = vld [vmem:[%s736 + $0xc] sm:$0xf]
        %v829 = vld [vmem:[%s736 + $0x10] sm:$0xf]
        %v830 = vld [vmem:[%s736 + $0x14] sm:$0xf]
        %v831 = vld [vmem:[%s736 + $0x18] sm:$0xf]
        %v832 = vld [vmem:[%s736 + $0x1c] sm:$0xf]
        %v833 = vld [vmem:[%s736 + $0x20] sm:$0xf]
        %v834 = vld [vmem:[%s736 + $0x24] sm:$0xf]
        %v835 = vld [vmem:[%s736 + $0x28] sm:$0xf]
        %v836 = vld [vmem:[%s736 + $0x2c] sm:$0xf]
        %v837 = vld [vmem:[%s736 + $0x30] sm:$0xf]
        %v838 = vld [vmem:[%s736 + $0x34] sm:$0xf]
        %v839 = vld [vmem:[%s736 + $0x38] sm:$0xf]
        %v840 = vld [vmem:[%s736 + $0x3c] sm:$0xf]
        %v841 = vld [vmem:[%s736 + $0x40] sm:$0xf]
        %v842 = vld [vmem:[%s736 + $0x44] sm:$0xf]
        %v843 = vld [vmem:[%s736 + $0x48] sm:$0xf]
        %v844 = vld [vmem:[%s736 + $0x4c] sm:$0xf]
        %v845 = vld [vmem:[%s736 + $0x50] sm:$0xf]
        %v846 = vld [vmem:[%s736 + $0x54] sm:$0xf]
        %v847 = vld [vmem:[%s736 + $0x58] sm:$0xf]
        %v848 = vld [vmem:[%s736 + $0x5c] sm:$0xf]
        %v849 = vld [vmem:[%s736 + $0x60] sm:$0xf]
        %v850 = vld [vmem:[%s736 + $0x64] sm:$0xf]
        %v851 = vld [vmem:[%s736 + $0x68] sm:$0xf]
        %v852 = vld [vmem:[%s736 + $0x6c] sm:$0xf]
        %v853 = vld [vmem:[%s736 + $0x70] sm:$0xf]
        %v854 = vld [vmem:[%s736 + $0x74] sm:$0xf]
        %v855 = vld [vmem:[%s736 + $0x78] sm:$0xf]
        %v856 = vld [vmem:[%s736 + $0x7c] sm:$0xf]
        %v857 = vld [vmem:[%s736 + $0x80] sm:$0xf]
        %v858 = vld [vmem:[%s736 + $0x84] sm:$0xf]
        %v859 = vld [vmem:[%s736 + $0x88] sm:$0xf]
        %v860 = vld [vmem:[%s736 + $0x8c] sm:$0xf]
        %v861 = vld [vmem:[%s736 + $0x90] sm:$0xf]
        %v862 = vld [vmem:[%s736 + $0x94] sm:$0xf]
        %v863 = vld [vmem:[%s736 + $0x98] sm:$0xf]
        %v864 = vld [vmem:[%s736 + $0x9c] sm:$0xf]
        %v865 = vld [vmem:[%s736 + $0xa0] sm:$0xf]
        %v866 = vld [vmem:[%s736 + $0xa4] sm:$0xf]
        %v867 = vld [vmem:[%s736 + $0xa8] sm:$0xf]
        %v868 = vld [vmem:[%s736 + $0xac] sm:$0xf]
        %v869 = vld [vmem:[%s736 + $0xb0] sm:$0xf]
        %v870 = vld [vmem:[%s736 + $0xb4] sm:$0xf]
        %v871 = vld [vmem:[%s736 + $0xb8] sm:$0xf]
        %v872 = vld [vmem:[%s736 + $0xbc] sm:$0xf]
        %v873 = vld [vmem:[%s740] sm:$0x1]
        %v874 = vld [vmem:[%s740 + $0x1] sm:$0x1]
        %v875 = vld [vmem:[%s740 + $0x2] sm:$0x1]
        %v876 = vld [vmem:[%s740 + $0x3] sm:$0x1]
        %v877 = vld [vmem:[%s740 + $0x4] sm:$0x1]
        %v878 = vld [vmem:[%s740 + $0x5] sm:$0x1]
        %v879 = vld [vmem:[%s740 + $0x6] sm:$0x1]
        %v880 = vld [vmem:[%s740 + $0x7] sm:$0x1]
        %v881 = vld [vmem:[%s740 + $0x8] sm:$0x1]
        %v882 = vld [vmem:[%s740 + $0x9] sm:$0x1]
        %v883 = vld [vmem:[%s740 + $0xa] sm:$0x1]
        %v884 = vld [vmem:[%s740 + $0xb] sm:$0x1]
        %v889 = vlaneseq
        %v890 = vshrl.u32 %v889, 7
        %v891 = vsub.s32 0, %v890
        %v892 = vrot.slane %v873, %v891
        %v893 = vlaneseq
        %v894 = vshrl.u32 %v893, 7
        %v895 = vsub.s32 0, %v894
        %v896 = vrot.slane %v874, %v895
        %v897 = vlaneseq
        %v898 = vshrl.u32 %v897, 7
        %v899 = vsub.s32 0, %v898
        %v900 = vrot.slane %v875, %v899
        %v901 = vlaneseq
        %v902 = vshrl.u32 %v901, 7
        %v903 = vsub.s32 0, %v902
        %v904 = vrot.slane %v876, %v903
        %v913 = vunpack.c.l.b16 %v825
        %v914 = vunpack.c.l.b16 %v826
        %v915 = vunpack.c.l.b16 %v827
        %v916 = vunpack.c.l.b16 %v828
        %v917 = vpack.c.b16 %v914, %v913
        %v918 = vpack.c.b16 %v916, %v915
        %v922 = vsel %vm795, %v824, 0
        %924 = vmatprep.subr.bf16.mxu0 0
        %925 = vmatpush1.bf16.msra.mxu0 %v917
        %926 = vmatprep.subr.bf16.mxu0 0
        %927 = vmatpush1.bf16.msra.mxu0 %v918
        %928 = vmatprep.subr.bf16.mxu0 0
        %929 = vmatpush1.bf16.msra.mxu0 0
        %930 = vmatprep.subr.bf16.mxu0 0
        %931 = vmatpush1.bf16.msra.mxu0 0
        %932 = vmatprep.subr.bf16.mxu0 0
        %933 = vmatpush1.bf16.msra.mxu0 0
        %934 = vmatprep.subr.bf16.mxu0 0
        %935 = vmatpush1.bf16.msra.mxu0 0
        %936 = vmatprep.subr.bf16.mxu0 0
        %937 = vmatpush1.bf16.msra.mxu0 0
        %938 = vmatprep.subr.bf16.mxu0 0
        %939 = vmatpush1.bf16.msra.mxu0 0
        %940 = vmatprep.subr.bf16.mxu0 0
        %941 = vmatpush1.bf16.msra.mxu0 0
        %942 = vmatprep.subr.bf16.mxu0 0
        %943 = vmatpush1.bf16.msra.mxu0 0
        %944 = vmatprep.subr.bf16.mxu0 0
        %945 = vmatpush1.bf16.msra.mxu0 0
        %946 = vmatprep.subr.bf16.mxu0 0
        %947 = vmatpush1.bf16.msra.mxu0 0
        %948 = vmatprep.subr.bf16.mxu0 0
        %949 = vmatpush1.bf16.msra.mxu0 0
        %950 = vmatprep.subr.bf16.mxu0 0
        %951 = vmatpush1.bf16.msra.mxu0 0
        %952 = vmatprep.subr.bf16.mxu0 0
        %953 = vmatpush1.bf16.msra.mxu0 0
        %954 = vmatprep.subr.bf16.mxu0 0
        %955 = vmatpush1.bf16.msra.mxu0 0
        %956 = vmatprep.mubr.bf16.mxu0 0
        %957 = vmatmul.mubr.bf16.gmra.mrb[0].mxu0 %v922
        %v958 = vpop.f32.mrb[0].mxu0
        %v959 = vadd.f32 %v892, %v958
        %v960 = vpop.f32.mrb[0].mxu0
        %v961 = vpop.f32.mrb[0].mxu0
        %v962 = vpop.f32.mrb[0].mxu0
        %963 = vdwg.mxu0
        %v968 = vunpack.c.l.b16 %v829
        %v969 = vunpack.c.l.b16 %v830
        %v970 = vunpack.c.l.b16 %v831
        %v971 = vunpack.c.l.b16 %v832
        %v972 = vpack.c.b16 %v969, %v968
        %v973 = vpack.c.b16 %v971, %v970
        %976 = vmatprep.subr.bf16.mxu0 0
        %977 = vmatpush1.bf16.msra.mxu0 %v972
        %978 = vmatprep.subr.bf16.mxu0 0
        %979 = vmatpush1.bf16.msra.mxu0 %v973
        %980 = vmatprep.subr.bf16.mxu0 0
        %981 = vmatpush1.bf16.msra.mxu0 0
        %982 = vmatprep.subr.bf16.mxu0 0
        %983 = vmatpush1.bf16.msra.mxu0 0
        %984 = vmatprep.subr.bf16.mxu0 0
        %985 = vmatpush1.bf16.msra.mxu0 0
        %986 = vmatprep.subr.bf16.mxu0 0
        %987 = vmatpush1.bf16.msra.mxu0 0
        %988 = vmatprep.subr.bf16.mxu0 0
        %989 = vmatpush1.bf16.msra.mxu0 0
        %990 = vmatprep.subr.bf16.mxu0 0
        %991 = vmatpush1.bf16.msra.mxu0 0
        %992 = vmatprep.subr.bf16.mxu0 0
        %993 = vmatpush1.bf16.msra.mxu0 0
        %994 = vmatprep.subr.bf16.mxu0 0
        %995 = vmatpush1.bf16.msra.mxu0 0
        %996 = vmatprep.subr.bf16.mxu0 0
        %997 = vmatpush1.bf16.msra.mxu0 0
        %998 = vmatprep.subr.bf16.mxu0 0
        %999 = vmatpush1.bf16.msra.mxu0 0
        %1000 = vmatprep.subr.bf16.mxu0 0
        %1001 = vmatpush1.bf16.msra.mxu0 0
        %1002 = vmatprep.subr.bf16.mxu0 0
        %1003 = vmatpush1.bf16.msra.mxu0 0
        %1004 = vmatprep.subr.bf16.mxu0 0
        %1005 = vmatpush1.bf16.msra.mxu0 0
        %1006 = vmatprep.subr.bf16.mxu0 0
        %1007 = vmatpush1.bf16.msra.mxu0 0
        %1008 = vmatprep.mubr.bf16.mxu0 0
        %1009 = vmatmul.mubr.bf16.gmra.mrb[0].mxu0 %v922
        %v1010 = vpop.f32.mrb[0].mxu0
        %v1011 = vadd.f32 %v896, %v1010
        %v1012 = vpop.f32.mrb[0].mxu0
        %v1013 = vpop.f32.mrb[0].mxu0
        %v1014 = vpop.f32.mrb[0].mxu0
        %1015 = vdwg.mxu0
        %v1020 = vunpack.c.l.b16 %v833
        %v1021 = vunpack.c.l.b16 %v834
        %v1022 = vunpack.c.l.b16 %v835
        %v1023 = vunpack.c.l.b16 %v836
        %v1024 = vpack.c.b16 %v1021, %v1020
        %v1025 = vpack.c.b16 %v1023, %v1022
        %1028 = vmatprep.subr.bf16.mxu0 0
        %1029 = vmatpush1.bf16.msra.mxu0 %v1024
        %1030 = vmatprep.subr.bf16.mxu0 0
        %1031 = vmatpush1.bf16.msra.mxu0 %v1025
        %1032 = vmatprep.subr.bf16.mxu0 0
        %1033 = vmatpush1.bf16.msra.mxu0 0
        %1034 = vmatprep.subr.bf16.mxu0 0
        %1035 = vmatpush1.bf16.msra.mxu0 0
        %1036 = vmatprep.subr.bf16.mxu0 0
        %1037 = vmatpush1.bf16.msra.mxu0 0
        %1038 = vmatprep.subr.bf16.mxu0 0
        %1039 = vmatpush1.bf16.msra.mxu0 0
        %1040 = vmatprep.subr.bf16.mxu0 0
        %1041 = vmatpush1.bf16.msra.mxu0 0
        %1042 = vmatprep.subr.bf16.mxu0 0
        %1043 = vmatpush1.bf16.msra.mxu0 0
        %1044 = vmatprep.subr.bf16.mxu0 0
        %1045 = vmatpush1.bf16.msra.mxu0 0
        %1046 = vmatprep.subr.bf16.mxu0 0
        %1047 = vmatpush1.bf16.msra.mxu0 0
        %1048 = vmatprep.subr.bf16.mxu0 0
        %1049 = vmatpush1.bf16.msra.mxu0 0
        %1050 = vmatprep.subr.bf16.mxu0 0
        %1051 = vmatpush1.bf16.msra.mxu0 0
        %1052 = vmatprep.subr.bf16.mxu0 0
        %1053 = vmatpush1.bf16.msra.mxu0 0
        %1054 = vmatprep.subr.bf16.mxu0 0
        %1055 = vmatpush1.bf16.msra.mxu0 0
        %1056 = vmatprep.subr.bf16.mxu0 0
        %1057 = vmatpush1.bf16.msra.mxu0 0
        %1058 = vmatprep.subr.bf16.mxu0 0
        %1059 = vmatpush1.bf16.msra.mxu0 0
        %1060 = vmatprep.mubr.bf16.mxu0 0
        %1061 = vmatmul.mubr.bf16.gmra.mrb[0].mxu0 %v922
        %v1062 = vpop.f32.mrb[0].mxu0
        %v1063 = vadd.f32 %v900, %v1062
        %v1064 = vpop.f32.mrb[0].mxu0
        %v1065 = vpop.f32.mrb[0].mxu0
        %v1066 = vpop.f32.mrb[0].mxu0
        %1067 = vdwg.mxu0
        %v1072 = vunpack.c.l.b16 %v837
        %v1073 = vunpack.c.l.b16 %v838
        %v1074 = vunpack.c.l.b16 %v839
        %v1075 = vunpack.c.l.b16 %v840
        %v1076 = vpack.c.b16 %v1073, %v1072
        %v1077 = vpack.c.b16 %v1075, %v1074
        %1080 = vmatprep.subr.bf16.mxu0 0
        %1081 = vmatpush1.bf16.msra.mxu0 %v1076
        %1082 = vmatprep.subr.bf16.mxu0 0
        %1083 = vmatpush1.bf16.msra.mxu0 %v1077
        %1084 = vmatprep.subr.bf16.mxu0 0
        %1085 = vmatpush1.bf16.msra.mxu0 0
        %1086 = vmatprep.subr.bf16.mxu0 0
        %1087 = vmatpush1.bf16.msra.mxu0 0
        %1088 = vmatprep.subr.bf16.mxu0 0
        %1089 = vmatpush1.bf16.msra.mxu0 0
        %1090 = vmatprep.subr.bf16.mxu0 0
        %1091 = vmatpush1.bf16.msra.mxu0 0
        %1092 = vmatprep.subr.bf16.mxu0 0
        %1093 = vmatpush1.bf16.msra.mxu0 0
        %1094 = vmatprep.subr.bf16.mxu0 0
        %1095 = vmatpush1.bf16.msra.mxu0 0
        %1096 = vmatprep.subr.bf16.mxu0 0
        %1097 = vmatpush1.bf16.msra.mxu0 0
        %1098 = vmatprep.subr.bf16.mxu0 0
        %1099 = vmatpush1.bf16.msra.mxu0 0
        %1100 = vmatprep.subr.bf16.mxu0 0
        %1101 = vmatpush1.bf16.msra.mxu0 0
        %1102 = vmatprep.subr.bf16.mxu0 0
        %1103 = vmatpush1.bf16.msra.mxu0 0
        %1104 = vmatprep.subr.bf16.mxu0 0
        %1105 = vmatpush1.bf16.msra.mxu0 0
        %1106 = vmatprep.subr.bf16.mxu0 0
        %1107 = vmatpush1.bf16.msra.mxu0 0
        %1108 = vmatprep.subr.bf16.mxu0 0
        %1109 = vmatpush1.bf16.msra.mxu0 0
        %1110 = vmatprep.subr.bf16.mxu0 0
        %1111 = vmatpush1.bf16.msra.mxu0 0
        %1112 = vmatprep.mubr.bf16.mxu0 0
        %1113 = vmatmul.mubr.bf16.gmra.mrb[0].mxu0 %v922
        %v1114 = vpop.f32.mrb[0].mxu0
        %v1115 = vadd.f32 %v904, %v1114
        %v1116 = vpop.f32.mrb[0].mxu0
        %v1117 = vpop.f32.mrb[0].mxu0
        %v1118 = vpop.f32.mrb[0].mxu0
        %1119 = vdwg.mxu0
        %v1124 = vlaneseq
        %v1125 = vshrl.u32 %v1124, 7
        %v1126 = vsub.s32 0, %v1125
        %v1127 = vrot.slane %v877, %v1126
        %v1128 = vlaneseq
        %v1129 = vshrl.u32 %v1128, 7
        %v1130 = vsub.s32 0, %v1129
        %v1131 = vrot.slane %v878, %v1130
        %v1132 = vlaneseq
        %v1133 = vshrl.u32 %v1132, 7
        %v1134 = vsub.s32 0, %v1133
        %v1135 = vrot.slane %v879, %v1134
        %v1136 = vlaneseq
        %v1137 = vshrl.u32 %v1136, 7
        %v1138 = vsub.s32 0, %v1137
        %v1139 = vrot.slane %v880, %v1138
        %v1148 = vunpack.c.l.b16 %v841
        %v1149 = vunpack.c.l.b16 %v842
        %v1150 = vunpack.c.l.b16 %v843
        %v1151 = vunpack.c.l.b16 %v844
        %v1152 = vpack.c.b16 %v1149, %v1148
        %v1153 = vpack.c.b16 %v1151, %v1150
        %1156 = vmatprep.subr.bf16.mxu0 0
        %1157 = vmatpush1.bf16.msra.mxu0 %v1152
        %1158 = vmatprep.subr.bf16.mxu0 0
        %1159 = vmatpush1.bf16.msra.mxu0 %v1153
        %1160 = vmatprep.subr.bf16.mxu0 0
        %1161 = vmatpush1.bf16.msra.mxu0 0
        %1162 = vmatprep.subr.bf16.mxu0 0
        %1163 = vmatpush1.bf16.msra.mxu0 0
        %1164 = vmatprep.subr.bf16.mxu0 0
        %1165 = vmatpush1.bf16.msra.mxu0 0
        %1166 = vmatprep.subr.bf16.mxu0 0
        %1167 = vmatpush1.bf16.msra.mxu0 0
        %1168 = vmatprep.subr.bf16.mxu0 0
        %1169 = vmatpush1.bf16.msra.mxu0 0
        %1170 = vmatprep.subr.bf16.mxu0 0
        %1171 = vmatpush1.bf16.msra.mxu0 0
        %1172 = vmatprep.subr.bf16.mxu0 0
        %1173 = vmatpush1.bf16.msra.mxu0 0
        %1174 = vmatprep.subr.bf16.mxu0 0
        %1175 = vmatpush1.bf16.msra.mxu0 0
        %1176 = vmatprep.subr.bf16.mxu0 0
        %1177 = vmatpush1.bf16.msra.mxu0 0
        %1178 = vmatprep.subr.bf16.mxu0 0
        %1179 = vmatpush1.bf16.msra.mxu0 0
        %1180 = vmatprep.subr.bf16.mxu0 0
        %1181 = vmatpush1.bf16.msra.mxu0 0
        %1182 = vmatprep.subr.bf16.mxu0 0
        %1183 = vmatpush1.bf16.msra.mxu0 0
        %1184 = vmatprep.subr.bf16.mxu0 0
        %1185 = vmatpush1.bf16.msra.mxu0 0
        %1186 = vmatprep.subr.bf16.mxu0 0
        %1187 = vmatpush1.bf16.msra.mxu0 0
        %1188 = vmatprep.mubr.bf16.mxu0 0
        %1189 = vmatmul.mubr.bf16.gmra.mrb[0].mxu0 %v922
        %v1190 = vpop.f32.mrb[0].mxu0
        %v1191 = vadd.f32 %v1127, %v1190
        %v1192 = vpop.f32.mrb[0].mxu0
        %v1193 = vpop.f32.mrb[0].mxu0
        %v1194 = vpop.f32.mrb[0].mxu0
        %1195 = vdwg.mxu0
        %v1200 = vunpack.c.l.b16 %v845
        %v1201 = vunpack.c.l.b16 %v846
        %v1202 = vunpack.c.l.b16 %v847
        %v1203 = vunpack.c.l.b16 %v848
        %v1204 = vpack.c.b16 %v1201, %v1200
        %v1205 = vpack.c.b16 %v1203, %v1202
        %1208 = vmatprep.subr.bf16.mxu0 0
        %1209 = vmatpush1.bf16.msra.mxu0 %v1204
        %1210 = vmatprep.subr.bf16.mxu0 0
        %1211 = vmatpush1.bf16.msra.mxu0 %v1205
        %1212 = vmatprep.subr.bf16.mxu0 0
        %1213 = vmatpush1.bf16.msra.mxu0 0
        %1214 = vmatprep.subr.bf16.mxu0 0
        %1215 = vmatpush1.bf16.msra.mxu0 0
        %1216 = vmatprep.subr.bf16.mxu0 0
        %1217 = vmatpush1.bf16.msra.mxu0 0
        %1218 = vmatprep.subr.bf16.mxu0 0
        %1219 = vmatpush1.bf16.msra.mxu0 0
        %1220 = vmatprep.subr.bf16.mxu0 0
        %1221 = vmatpush1.bf16.msra.mxu0 0
        %1222 = vmatprep.subr.bf16.mxu0 0
        %1223 = vmatpush1.bf16.msra.mxu0 0
        %1224 = vmatprep.subr.bf16.mxu0 0
        %1225 = vmatpush1.bf16.msra.mxu0 0
        %1226 = vmatprep.subr.bf16.mxu0 0
        %1227 = vmatpush1.bf16.msra.mxu0 0
        %1228 = vmatprep.subr.bf16.mxu0 0
        %1229 = vmatpush1.bf16.msra.mxu0 0
        %1230 = vmatprep.subr.bf16.mxu0 0
        %1231 = vmatpush1.bf16.msra.mxu0 0
        %1232 = vmatprep.subr.bf16.mxu0 0
        %1233 = vmatpush1.bf16.msra.mxu0 0
        %1234 = vmatprep.subr.bf16.mxu0 0
        %1235 = vmatpush1.bf16.msra.mxu0 0
        %1236 = vmatprep.subr.bf16.mxu0 0
        %1237 = vmatpush1.bf16.msra.mxu0 0
        %1238 = vmatprep.subr.bf16.mxu0 0
        %1239 = vmatpush1.bf16.msra.mxu0 0
        %1240 = vmatprep.mubr.bf16.mxu0 0
        %1241 = vmatmul.mubr.bf16.gmra.mrb[0].mxu0 %v922
        %v1242 = vpop.f32.mrb[0].mxu0
        %v1243 = vadd.f32 %v1131, %v1242
        %v1244 = vpop.f32.mrb[0].mxu0
        %v1245 = vpop.f32.mrb[0].mxu0
        %v1246 = vpop.f32.mrb[0].mxu0
        %1247 = vdwg.mxu0
        %v1252 = vunpack.c.l.b16 %v849
        %v1253 = vunpack.c.l.b16 %v850
        %v1254 = vunpack.c.l.b16 %v851
        %v1255 = vunpack.c.l.b16 %v852
        %v1256 = vpack.c.b16 %v1253, %v1252
        %v1257 = vpack.c.b16 %v1255, %v1254
        %1260 = vmatprep.subr.bf16.mxu0 0
        %1261 = vmatpush1.bf16.msra.mxu0 %v1256
        %1262 = vmatprep.subr.bf16.mxu0 0
        %1263 = vmatpush1.bf16.msra.mxu0 %v1257
        %1264 = vmatprep.subr.bf16.mxu0 0
        %1265 = vmatpush1.bf16.msra.mxu0 0
        %1266 = vmatprep.subr.bf16.mxu0 0
        %1267 = vmatpush1.bf16.msra.mxu0 0
        %1268 = vmatprep.subr.bf16.mxu0 0
        %1269 = vmatpush1.bf16.msra.mxu0 0
        %1270 = vmatprep.subr.bf16.mxu0 0
        %1271 = vmatpush1.bf16.msra.mxu0 0
        %1272 = vmatprep.subr.bf16.mxu0 0
        %1273 = vmatpush1.bf16.msra.mxu0 0
        %1274 = vmatprep.subr.bf16.mxu0 0
        %1275 = vmatpush1.bf16.msra.mxu0 0
        %1276 = vmatprep.subr.bf16.mxu0 0
        %1277 = vmatpush1.bf16.msra.mxu0 0
        %1278 = vmatprep.subr.bf16.mxu0 0
        %1279 = vmatpush1.bf16.msra.mxu0 0
        %1280 = vmatprep.subr.bf16.mxu0 0
        %1281 = vmatpush1.bf16.msra.mxu0 0
        %1282 = vmatprep.subr.bf16.mxu0 0
        %1283 = vmatpush1.bf16.msra.mxu0 0
        %1284 = vmatprep.subr.bf16.mxu0 0
        %1285 = vmatpush1.bf16.msra.mxu0 0
        %1286 = vmatprep.subr.bf16.mxu0 0
        %1287 = vmatpush1.bf16.msra.mxu0 0
        %1288 = vmatprep.subr.bf16.mxu0 0
        %1289 = vmatpush1.bf16.msra.mxu0 0
        %1290 = vmatprep.subr.bf16.mxu0 0
        %1291 = vmatpush1.bf16.msra.mxu0 0
        %1292 = vmatprep.mubr.bf16.mxu0 0
        %1293 = vmatmul.mubr.bf16.gmra.mrb[0].mxu0 %v922
        %v1294 = vpop.f32.mrb[0].mxu0
        %v1295 = vadd.f32 %v1135, %v1294
        %v1296 = vpop.f32.mrb[0].mxu0
        %v1297 = vpop.f32.mrb[0].mxu0
        %v1298 = vpop.f32.mrb[0].mxu0
        %1299 = vdwg.mxu0
        %v1304 = vunpack.c.l.b16 %v853
        %v1305 = vunpack.c.l.b16 %v854
        %v1306 = vunpack.c.l.b16 %v855
        %v1307 = vunpack.c.l.b16 %v856
        %v1308 = vpack.c.b16 %v1305, %v1304
        %v1309 = vpack.c.b16 %v1307, %v1306
        %1312 = vmatprep.subr.bf16.mxu0 0
        %1313 = vmatpush1.bf16.msra.mxu0 %v1308
        %1314 = vmatprep.subr.bf16.mxu0 0
        %1315 = vmatpush1.bf16.msra.mxu0 %v1309
        %1316 = vmatprep.subr.bf16.mxu0 0
        %1317 = vmatpush1.bf16.msra.mxu0 0
        %1318 = vmatprep.subr.bf16.mxu0 0
        %1319 = vmatpush1.bf16.msra.mxu0 0
        %1320 = vmatprep.subr.bf16.mxu0 0
        %1321 = vmatpush1.bf16.msra.mxu0 0
        %1322 = vmatprep.subr.bf16.mxu0 0
        %1323 = vmatpush1.bf16.msra.mxu0 0
        %1324 = vmatprep.subr.bf16.mxu0 0
        %1325 = vmatpush1.bf16.msra.mxu0 0
        %1326 = vmatprep.subr.bf16.mxu0 0
        %1327 = vmatpush1.bf16.msra.mxu0 0
        %1328 = vmatprep.subr.bf16.mxu0 0
        %1329 = vmatpush1.bf16.msra.mxu0 0
        %1330 = vmatprep.subr.bf16.mxu0 0
        %1331 = vmatpush1.bf16.msra.mxu0 0
        %1332 = vmatprep.subr.bf16.mxu0 0
        %1333 = vmatpush1.bf16.msra.mxu0 0
        %1334 = vmatprep.subr.bf16.mxu0 0
        %1335 = vmatpush1.bf16.msra.mxu0 0
        %1336 = vmatprep.subr.bf16.mxu0 0
        %1337 = vmatpush1.bf16.msra.mxu0 0
        %1338 = vmatprep.subr.bf16.mxu0 0
        %1339 = vmatpush1.bf16.msra.mxu0 0
        %1340 = vmatprep.subr.bf16.mxu0 0
        %1341 = vmatpush1.bf16.msra.mxu0 0
        %1342 = vmatprep.subr.bf16.mxu0 0
        %1343 = vmatpush1.bf16.msra.mxu0 0
        %1344 = vmatprep.mubr.bf16.mxu0 0
        %1345 = vmatmul.mubr.bf16.gmra.mrb[0].mxu0 %v922
        %v1346 = vpop.f32.mrb[0].mxu0
        %v1347 = vadd.f32 %v1139, %v1346
        %v1348 = vpop.f32.mrb[0].mxu0
        %v1349 = vpop.f32.mrb[0].mxu0
        %v1350 = vpop.f32.mrb[0].mxu0
        %1351 = vdwg.mxu0
        %v1356 = vlaneseq
        %v1357 = vshrl.u32 %v1356, 7
        %v1358 = vsub.s32 0, %v1357
        %v1359 = vrot.slane %v881, %v1358
        %v1360 = vlaneseq
        %v1361 = vshrl.u32 %v1360, 7
        %v1362 = vsub.s32 0, %v1361
        %v1363 = vrot.slane %v882, %v1362
        %v1364 = vlaneseq
        %v1365 = vshrl.u32 %v1364, 7
        %v1366 = vsub.s32 0, %v1365
        %v1367 = vrot.slane %v883, %v1366
        %v1368 = vlaneseq
        %v1369 = vshrl.u32 %v1368, 7
        %v1370 = vsub.s32 0, %v1369
        %v1371 = vrot.slane %v884, %v1370
        %v1380 = vunpack.c.l.b16 %v857
        %v1381 = vunpack.c.l.b16 %v858
        %v1382 = vunpack.c.l.b16 %v859
        %v1383 = vunpack.c.l.b16 %v860
        %v1384 = vpack.c.b16 %v1381, %v1380
        %v1385 = vpack.c.b16 %v1383, %v1382
        %1388 = vmatprep.subr.bf16.mxu0 0
        %1389 = vmatpush1.bf16.msra.mxu0 %v1384
        %1390 = vmatprep.subr.bf16.mxu0 0
        %1391 = vmatpush1.bf16.msra.mxu0 %v1385
        %1392 = vmatprep.subr.bf16.mxu0 0
        %1393 = vmatpush1.bf16.msra.mxu0 0
        %1394 = vmatprep.subr.bf16.mxu0 0
        %1395 = vmatpush1.bf16.msra.mxu0 0
        %1396 = vmatprep.subr.bf16.mxu0 0
        %1397 = vmatpush1.bf16.msra.mxu0 0
        %1398 = vmatprep.subr.bf16.mxu0 0
        %1399 = vmatpush1.bf16.msra.mxu0 0
        %1400 = vmatprep.subr.bf16.mxu0 0
        %1401 = vmatpush1.bf16.msra.mxu0 0
        %1402 = vmatprep.subr.bf16.mxu0 0
        %1403 = vmatpush1.bf16.msra.mxu0 0
        %1404 = vmatprep.subr.bf16.mxu0 0
        %1405 = vmatpush1.bf16.msra.mxu0 0
        %1406 = vmatprep.subr.bf16.mxu0 0
        %1407 = vmatpush1.bf16.msra.mxu0 0
        %1408 = vmatprep.subr.bf16.mxu0 0
        %1409 = vmatpush1.bf16.msra.mxu0 0
        %1410 = vmatprep.subr.bf16.mxu0 0
        %1411 = vmatpush1.bf16.msra.mxu0 0
        %1412 = vmatprep.subr.bf16.mxu0 0
        %1413 = vmatpush1.bf16.msra.mxu0 0
        %1414 = vmatprep.subr.bf16.mxu0 0
        %1415 = vmatpush1.bf16.msra.mxu0 0
        %1416 = vmatprep.subr.bf16.mxu0 0
        %1417 = vmatpush1.bf16.msra.mxu0 0
        %1418 = vmatprep.subr.bf16.mxu0 0
        %1419 = vmatpush1.bf16.msra.mxu0 0
        %1420 = vmatprep.mubr.bf16.mxu0 0
        %1421 = vmatmul.mubr.bf16.gmra.mrb[0].mxu0 %v922
        %v1422 = vpop.f32.mrb[0].mxu0
        %v1423 = vadd.f32 %v1359, %v1422
        %v1424 = vpop.f32.mrb[0].mxu0
        %v1425 = vpop.f32.mrb[0].mxu0
        %v1426 = vpop.f32.mrb[0].mxu0
        %1427 = vdwg.mxu0
        %v1432 = vunpack.c.l.b16 %v861
        %v1433 = vunpack.c.l.b16 %v862
        %v1434 = vunpack.c.l.b16 %v863
        %v1435 = vunpack.c.l.b16 %v864
        %v1436 = vpack.c.b16 %v1433, %v1432
        %v1437 = vpack.c.b16 %v1435, %v1434
        %1440 = vmatprep.subr.bf16.mxu0 0
        %1441 = vmatpush1.bf16.msra.mxu0 %v1436
        %1442 = vmatprep.subr.bf16.mxu0 0
        %1443 = vmatpush1.bf16.msra.mxu0 %v1437
        %1444 = vmatprep.subr.bf16.mxu0 0
        %1445 = vmatpush1.bf16.msra.mxu0 0
        %1446 = vmatprep.subr.bf16.mxu0 0
        %1447 = vmatpush1.bf16.msra.mxu0 0
        %1448 = vmatprep.subr.bf16.mxu0 0
        %1449 = vmatpush1.bf16.msra.mxu0 0
        %1450 = vmatprep.subr.bf16.mxu0 0
        %1451 = vmatpush1.bf16.msra.mxu0 0
        %1452 = vmatprep.subr.bf16.mxu0 0
        %1453 = vmatpush1.bf16.msra.mxu0 0
        %1454 = vmatprep.subr.bf16.mxu0 0
        %1455 = vmatpush1.bf16.msra.mxu0 0
        %1456 = vmatprep.subr.bf16.mxu0 0
        %1457 = vmatpush1.bf16.msra.mxu0 0
        %1458 = vmatprep.subr.bf16.mxu0 0
        %1459 = vmatpush1.bf16.msra.mxu0 0
        %1460 = vmatprep.subr.bf16.mxu0 0
        %1461 = vmatpush1.bf16.msra.mxu0 0
        %1462 = vmatprep.subr.bf16.mxu0 0
        %1463 = vmatpush1.bf16.msra.mxu0 0
        %1464 = vmatprep.subr.bf16.mxu0 0
        %1465 = vmatpush1.bf16.msra.mxu0 0
        %1466 = vmatprep.subr.bf16.mxu0 0
        %1467 = vmatpush1.bf16.msra.mxu0 0
        %1468 = vmatprep.subr.bf16.mxu0 0
        %1469 = vmatpush1.bf16.msra.mxu0 0
        %1470 = vmatprep.subr.bf16.mxu0 0
        %1471 = vmatpush1.bf16.msra.mxu0 0
        %1472 = vmatprep.mubr.bf16.mxu0 0
        %1473 = vmatmul.mubr.bf16.gmra.mrb[0].mxu0 %v922
        %v1474 = vpop.f32.mrb[0].mxu0
        %v1475 = vadd.f32 %v1363, %v1474
        %v1476 = vpop.f32.mrb[0].mxu0
        %v1477 = vpop.f32.mrb[0].mxu0
        %v1478 = vpop.f32.mrb[0].mxu0
        %1479 = vdwg.mxu0
        %v1484 = vunpack.c.l.b16 %v865
        %v1485 = vunpack.c.l.b16 %v866
        %v1486 = vunpack.c.l.b16 %v867
        %v1487 = vunpack.c.l.b16 %v868
        %v1488 = vpack.c.b16 %v1485, %v1484
        %v1489 = vpack.c.b16 %v1487, %v1486
        %1492 = vmatprep.subr.bf16.mxu0 0
        %1493 = vmatpush1.bf16.msra.mxu0 %v1488
        %1494 = vmatprep.subr.bf16.mxu0 0
        %1495 = vmatpush1.bf16.msra.mxu0 %v1489
        %1496 = vmatprep.subr.bf16.mxu0 0
        %1497 = vmatpush1.bf16.msra.mxu0 0
        %1498 = vmatprep.subr.bf16.mxu0 0
        %1499 = vmatpush1.bf16.msra.mxu0 0
        %1500 = vmatprep.subr.bf16.mxu0 0
        %1501 = vmatpush1.bf16.msra.mxu0 0
        %1502 = vmatprep.subr.bf16.mxu0 0
        %1503 = vmatpush1.bf16.msra.mxu0 0
        %1504 = vmatprep.subr.bf16.mxu0 0
        %1505 = vmatpush1.bf16.msra.mxu0 0
        %1506 = vmatprep.subr.bf16.mxu0 0
        %1507 = vmatpush1.bf16.msra.mxu0 0
        %1508 = vmatprep.subr.bf16.mxu0 0
        %1509 = vmatpush1.bf16.msra.mxu0 0
        %1510 = vmatprep.subr.bf16.mxu0 0
        %1511 = vmatpush1.bf16.msra.mxu0 0
        %1512 = vmatprep.subr.bf16.mxu0 0
        %1513 = vmatpush1.bf16.msra.mxu0 0
        %1514 = vmatprep.subr.bf16.mxu0 0
        %1515 = vmatpush1.bf16.msra.mxu0 0
        %1516 = vmatprep.subr.bf16.mxu0 0
        %1517 = vmatpush1.bf16.msra.mxu0 0
        %1518 = vmatprep.subr.bf16.mxu0 0
        %1519 = vmatpush1.bf16.msra.mxu0 0
        %1520 = vmatprep.subr.bf16.mxu0 0
        %1521 = vmatpush1.bf16.msra.mxu0 0
        %1522 = vmatprep.subr.bf16.mxu0 0
        %1523 = vmatpush1.bf16.msra.mxu0 0
        %1524 = vmatprep.mubr.bf16.mxu0 0
        %1525 = vmatmul.mubr.bf16.gmra.mrb[0].mxu0 %v922
        %v1526 = vpop.f32.mrb[0].mxu0
        %v1527 = vadd.f32 %v1367, %v1526
        %v1528 = vpop.f32.mrb[0].mxu0
        %v1529 = vpop.f32.mrb[0].mxu0
        %v1530 = vpop.f32.mrb[0].mxu0
        %1531 = vdwg.mxu0
        %v1536 = vunpack.c.l.b16 %v869
        %v1537 = vunpack.c.l.b16 %v870
        %v1538 = vunpack.c.l.b16 %v871
        %v1539 = vunpack.c.l.b16 %v872
        %v1540 = vpack.c.b16 %v1537, %v1536
        %v1541 = vpack.c.b16 %v1539, %v1538
        %1544 = vmatprep.subr.bf16.mxu0 0
        %1545 = vmatpush1.bf16.msra.mxu0 %v1540
        %1546 = vmatprep.subr.bf16.mxu0 0
        %1547 = vmatpush1.bf16.msra.mxu0 %v1541
        %1548 = vmatprep.subr.bf16.mxu0 0
        %1549 = vmatpush1.bf16.msra.mxu0 0
        %1550 = vmatprep.subr.bf16.mxu0 0
        %1551 = vmatpush1.bf16.msra.mxu0 0
        %1552 = vmatprep.subr.bf16.mxu0 0
        %1553 = vmatpush1.bf16.msra.mxu0 0
        %1554 = vmatprep.subr.bf16.mxu0 0
        %1555 = vmatpush1.bf16.msra.mxu0 0
        %1556 = vmatprep.subr.bf16.mxu0 0
        %1557 = vmatpush1.bf16.msra.mxu0 0
        %1558 = vmatprep.subr.bf16.mxu0 0
        %1559 = vmatpush1.bf16.msra.mxu0 0
        %1560 = vmatprep.subr.bf16.mxu0 0
        %1561 = vmatpush1.bf16.msra.mxu0 0
        %1562 = vmatprep.subr.bf16.mxu0 0
        %1563 = vmatpush1.bf16.msra.mxu0 0
        %1564 = vmatprep.subr.bf16.mxu0 0
        %1565 = vmatpush1.bf16.msra.mxu0 0
        %1566 = vmatprep.subr.bf16.mxu0 0
        %1567 = vmatpush1.bf16.msra.mxu0 0
        %1568 = vmatprep.subr.bf16.mxu0 0
        %1569 = vmatpush1.bf16.msra.mxu0 0
        %1570 = vmatprep.subr.bf16.mxu0 0
        %1571 = vmatpush1.bf16.msra.mxu0 0
        %1572 = vmatprep.subr.bf16.mxu0 0
        %1573 = vmatpush1.bf16.msra.mxu0 0
        %1574 = vmatprep.subr.bf16.mxu0 0
        %1575 = vmatpush1.bf16.msra.mxu0 0
        %1576 = vmatprep.mubr.bf16.mxu0 0
        %1577 = vmatmul.mubr.bf16.gmra.mrb[0].mxu0 %v922
        %v1578 = vpop.f32.mrb[0].mxu0
        %v1579 = vadd.f32 %v1371, %v1578
        %v1580 = vpop.f32.mrb[0].mxu0
        %v1581 = vpop.f32.mrb[0].mxu0
        %v1582 = vpop.f32.mrb[0].mxu0
        %1583 = vdwg.mxu0
        %v1584 = vmul.f32 %v959, 0.35355338
        %v1585 = vmul.f32 %v1011, 0.35355338
        %v1586 = vmul.f32 %v1063, 0.35355338
        %v1587 = vmul.f32 %v1115, 0.35355338
        %v1588 = vpack.c.bf16 %v1584, %v1584
        %v1589 = vpack.c.bf16 %v1585, %v1585
        %v1590 = vpack.c.bf16 %v1586, %v1586
        %v1591 = vpack.c.bf16 %v1587, %v1587
        %v1592 = vpack.c.bf16 %v1191, %v1191
        %v1593 = vpack.c.bf16 %v1243, %v1243
        %v1594 = vpack.c.bf16 %v1295, %v1295
        %v1595 = vpack.c.bf16 %v1347, %v1347
        %vm1596 = vcmask 64512
        %v1598 = vsel %vm1596, %v1588, 0
        %v1601 = vsel %vm1596, %v1592, 0
        %1603 = vmatprep.subr.bf16.mxu0 0
        %1604 = vmatpush1.bf16.xpose.msra.mxu0 %v1601
        %1605 = vmatprep.subr.bf16.mxu0 0
        %1606 = vmatpush1.bf16.xpose.msra.mxu0 0
        %1607 = vmatprep.subr.bf16.mxu0 0
        %1608 = vmatpush1.bf16.xpose.msra.mxu0 0
        %1609 = vmatprep.subr.bf16.mxu0 0
        %1610 = vmatpush1.bf16.xpose.msra.mxu0 0
        %1611 = vmatprep.subr.bf16.mxu0 0
        %1612 = vmatpush1.bf16.xpose.msra.mxu0 0
        %1613 = vmatprep.subr.bf16.mxu0 0
        %1614 = vmatpush1.bf16.xpose.msra.mxu0 0
        %1615 = vmatprep.subr.bf16.mxu0 0
        %1616 = vmatpush1.bf16.xpose.msra.mxu0 0
        %1617 = vmatprep.subr.bf16.mxu0 0
        %1618 = vmatpush1.bf16.xpose.msra.mxu0 0
        %1619 = vmatprep.subr.bf16.mxu0 0
        %1620 = vmatpush1.bf16.xpose.msra.mxu0 0
        %1621 = vmatprep.subr.bf16.mxu0 0
        %1622 = vmatpush1.bf16.xpose.msra.mxu0 0
        %1623 = vmatprep.subr.bf16.mxu0 0
        %1624 = vmatpush1.bf16.xpose.msra.mxu0 0
        %1625 = vmatprep.subr.bf16.mxu0 0
        %1626 = vmatpush1.bf16.xpose.msra.mxu0 0
        %1627 = vmatprep.subr.bf16.mxu0 0
        %1628 = vmatpush1.bf16.xpose.msra.mxu0 0
        %1629 = vmatprep.subr.bf16.mxu0 0
        %1630 = vmatpush1.bf16.xpose.msra.mxu0 0
        %1631 = vmatprep.subr.bf16.mxu0 0
        %1632 = vmatpush1.bf16.xpose.msra.mxu0 0
        %1633 = vmatprep.subr.bf16.mxu0 0
        %1634 = vmatpush1.bf16.xpose.msra.mxu0 0
        %1635 = vmatprep.mubr.bf16.mxu0 0
        %1636 = vmatmul.mubr.bf16.gmra.mrb[0].mxu0 %v1598
        %v1637 = vpop.f32.mrb[0].mxu0
        %v1638 = vadd.f32 0.0, %v1637
        %v1639 = vpop.f32.mrb[0].mxu0
        %v1640 = vpop.f32.mrb[0].mxu0
        %v1641 = vpop.f32.mrb[0].mxu0
        %1642 = vdwg.mxu0
        %v1644 = vsel %vm1596, %v1589, 0
        %v1647 = vsel %vm1596, %v1593, 0
        %1649 = vmatprep.subr.bf16.mxu0 0
        %1650 = vmatpush1.bf16.xpose.msra.mxu0 %v1647
        %1651 = vmatprep.subr.bf16.mxu0 0
        %1652 = vmatpush1.bf16.xpose.msra.mxu0 0
        %1653 = vmatprep.subr.bf16.mxu0 0
        %1654 = vmatpush1.bf16.xpose.msra.mxu0 0
        %1655 = vmatprep.subr.bf16.mxu0 0
        %1656 = vmatpush1.bf16.xpose.msra.mxu0 0
        %1657 = vmatprep.subr.bf16.mxu0 0
        %1658 = vmatpush1.bf16.xpose.msra.mxu0 0
        %1659 = vmatprep.subr.bf16.mxu0 0
        %1660 = vmatpush1.bf16.xpose.msra.mxu0 0
        %1661 = vmatprep.subr.bf16.mxu0 0
        %1662 = vmatpush1.bf16.xpose.msra.mxu0 0
        %1663 = vmatprep.subr.bf16.mxu0 0
        %1664 = vmatpush1.bf16.xpose.msra.mxu0 0
        %1665 = vmatprep.subr.bf16.mxu0 0
        %1666 = vmatpush1.bf16.xpose.msra.mxu0 0
        %1667 = vmatprep.subr.bf16.mxu0 0
        %1668 = vmatpush1.bf16.xpose.msra.mxu0 0
        %1669 = vmatprep.subr.bf16.mxu0 0
        %1670 = vmatpush1.bf16.xpose.msra.mxu0 0
        %1671 = vmatprep.subr.bf16.mxu0 0
        %1672 = vmatpush1.bf16.xpose.msra.mxu0 0
        %1673 = vmatprep.subr.bf16.mxu0 0
        %1674 = vmatpush1.bf16.xpose.msra.mxu0 0
        %1675 = vmatprep.subr.bf16.mxu0 0
        %1676 = vmatpush1.bf16.xpose.msra.mxu0 0
        %1677 = vmatprep.subr.bf16.mxu0 0
        %1678 = vmatpush1.bf16.xpose.msra.mxu0 0
        %1679 = vmatprep.subr.bf16.mxu0 0
        %1680 = vmatpush1.bf16.xpose.msra.mxu0 0
        %1681 = vmatprep.mubr.bf16.mxu0 0
        %1682 = vmatmul.mubr.bf16.gmra.mrb[0].mxu0 %v1644
        %v1683 = vpop.f32.mrb[0].mxu0
        %v1684 = vadd.f32 0.0, %v1683
        %v1685 = vpop.f32.mrb[0].mxu0
        %v1686 = vpop.f32.mrb[0].mxu0
        %v1687 = vpop.f32.mrb[0].mxu0
        %1688 = vdwg.mxu0
        %v1690 = vsel %vm1596, %v1590, 0
        %v1693 = vsel %vm1596, %v1594, 0
        %1695 = vmatprep.subr.bf16.mxu0 0
        %1696 = vmatpush1.bf16.xpose.msra.mxu0 %v1693
        %1697 = vmatprep.subr.bf16.mxu0 0
        %1698 = vmatpush1.bf16.xpose.msra.mxu0 0
        %1699 = vmatprep.subr.bf16.mxu0 0
        %1700 = vmatpush1.bf16.xpose.msra.mxu0 0
        %1701 = vmatprep.subr.bf16.mxu0 0
        %1702 = vmatpush1.bf16.xpose.msra.mxu0 0
        %1703 = vmatprep.subr.bf16.mxu0 0
        %1704 = vmatpush1.bf16.xpose.msra.mxu0 0
        %1705 = vmatprep.subr.bf16.mxu0 0
        %1706 = vmatpush1.bf16.xpose.msra.mxu0 0
        %1707 = vmatprep.subr.bf16.mxu0 0
        %1708 = vmatpush1.bf16.xpose.msra.mxu0 0
        %1709 = vmatprep.subr.bf16.mxu0 0
        %1710 = vmatpush1.bf16.xpose.msra.mxu0 0
        %1711 = vmatprep.subr.bf16.mxu0 0
        %1712 = vmatpush1.bf16.xpose.msra.mxu0 0
        %1713 = vmatprep.subr.bf16.mxu0 0
        %1714 = vmatpush1.bf16.xpose.msra.mxu0 0
        %1715 = vmatprep.subr.bf16.mxu0 0
        %1716 = vmatpush1.bf16.xpose.msra.mxu0 0
        %1717 = vmatprep.subr.bf16.mxu0 0
        %1718 = vmatpush1.bf16.xpose.msra.mxu0 0
        %1719 = vmatprep.subr.bf16.mxu0 0
        %1720 = vmatpush1.bf16.xpose.msra.mxu0 0
        %1721 = vmatprep.subr.bf16.mxu0 0
        %1722 = vmatpush1.bf16.xpose.msra.mxu0 0
        %1723 = vmatprep.subr.bf16.mxu0 0
        %1724 = vmatpush1.bf16.xpose.msra.mxu0 0
        %1725 = vmatprep.subr.bf16.mxu0 0
        %1726 = vmatpush1.bf16.xpose.msra.mxu0 0
        %1727 = vmatprep.mubr.bf16.mxu0 0
        %1728 = vmatmul.mubr.bf16.gmra.mrb[0].mxu0 %v1690
        %v1729 = vpop.f32.mrb[0].mxu0
        %v1730 = vadd.f32 0.0, %v1729
        %v1731 = vpop.f32.mrb[0].mxu0
        %v1732 = vpop.f32.mrb[0].mxu0
        %v1733 = vpop.f32.mrb[0].mxu0
        %1734 = vdwg.mxu0
        %v1736 = vsel %vm1596, %v1591, 0
        %v1739 = vsel %vm1596, %v1595, 0
        %1741 = vmatprep.subr.bf16.mxu0 0
        %1742 = vmatpush1.bf16.xpose.msra.mxu0 %v1739
        %1743 = vmatprep.subr.bf16.mxu0 0
        %1744 = vmatpush1.bf16.xpose.msra.mxu0 0
        %1745 = vmatprep.subr.bf16.mxu0 0
        %1746 = vmatpush1.bf16.xpose.msra.mxu0 0
        %1747 = vmatprep.subr.bf16.mxu0 0
        %1748 = vmatpush1.bf16.xpose.msra.mxu0 0
        %1749 = vmatprep.subr.bf16.mxu0 0
        %1750 = vmatpush1.bf16.xpose.msra.mxu0 0
        %1751 = vmatprep.subr.bf16.mxu0 0
        %1752 = vmatpush1.bf16.xpose.msra.mxu0 0
        %1753 = vmatprep.subr.bf16.mxu0 0
        %1754 = vmatpush1.bf16.xpose.msra.mxu0 0
        %1755 = vmatprep.subr.bf16.mxu0 0
        %1756 = vmatpush1.bf16.xpose.msra.mxu0 0
        %1757 = vmatprep.subr.bf16.mxu0 0
        %1758 = vmatpush1.bf16.xpose.msra.mxu0 0
        %1759 = vmatprep.subr.bf16.mxu0 0
        %1760 = vmatpush1.bf16.xpose.msra.mxu0 0
        %1761 = vmatprep.subr.bf16.mxu0 0
        %1762 = vmatpush1.bf16.xpose.msra.mxu0 0
        %1763 = vmatprep.subr.bf16.mxu0 0
        %1764 = vmatpush1.bf16.xpose.msra.mxu0 0
        %1765 = vmatprep.subr.bf16.mxu0 0
        %1766 = vmatpush1.bf16.xpose.msra.mxu0 0
        %1767 = vmatprep.subr.bf16.mxu0 0
        %1768 = vmatpush1.bf16.xpose.msra.mxu0 0
        %1769 = vmatprep.subr.bf16.mxu0 0
        %1770 = vmatpush1.bf16.xpose.msra.mxu0 0
        %1771 = vmatprep.subr.bf16.mxu0 0
        %1772 = vmatpush1.bf16.xpose.msra.mxu0 0
        %1773 = vmatprep.mubr.bf16.mxu0 0
        %1774 = vmatmul.mubr.bf16.gmra.mrb[0].mxu0 %v1736
        %v1775 = vpop.f32.mrb[0].mxu0
        %v1776 = vadd.f32 0.0, %v1775
        %v1777 = vpop.f32.mrb[0].mxu0
        %v1778 = vpop.f32.mrb[0].mxu0
        %v1779 = vpop.f32.mrb[0].mxu0
        %1780 = vdwg.mxu0
        %v1781 = vsel %vm1596, %v1638, -inf
        %1782 = vmax.xlane.f32.xlu0 %v1781
        %v1783 = vpop.xlane.xlu0 %1782
        %v1784 = vsel %vm1596, %v1684, -inf
        %1785 = vmax.xlane.f32.xlu0 %v1784
        %v1786 = vpop.xlane.xlu0 %1785
        %v1787 = vsel %vm1596, %v1730, -inf
        %1788 = vmax.xlane.f32.xlu0 %v1787
        %v1789 = vpop.xlane.xlu0 %1788
        %v1790 = vsel %vm1596, %v1776, -inf
        %1791 = vmax.xlane.f32.xlu0 %v1790
        %v1792 = vpop.xlane.xlu0 %1791
        %v1793 = vsub.f32 %v1638, %v1783
        %v1794 = vsub.f32 %v1684, %v1786
        %v1795 = vsub.f32 %v1730, %v1789
        %v1796 = vsub.f32 %v1776, %v1792
        %v1797 = vmul.f32 %v1793, 1.442695
        %v1798 = vpow.pop %v1797
        %v1799 = vmul.f32 %v1794, 1.442695
        %v1800 = vpow.pop %v1799
        %v1801 = vmul.f32 %v1795, 1.442695
        %v1802 = vpow.pop %v1801
        %v1803 = vmul.f32 %v1796, 1.442695
        %v1804 = vpow.pop %v1803
        %v1805 = vsel %vm1596, %v1798, 0.0
        %1806 = vadd.xlane.f32.xlu0 %v1805
        %v1807 = vpop.xlane.xlu0 %1806
        %v1808 = vsel %vm1596, %v1800, 0.0
        %1809 = vadd.xlane.f32.xlu0 %v1808
        %v1810 = vpop.xlane.xlu0 %1809
        %v1811 = vsel %vm1596, %v1802, 0.0
        %1812 = vadd.xlane.f32.xlu0 %v1811
        %v1813 = vpop.xlane.xlu0 %1812
        %v1814 = vsel %vm1596, %v1804, 0.0
        %1815 = vadd.xlane.f32.xlu0 %v1814
        %v1816 = vpop.xlane.xlu0 %1815
        %v1817 = vrcp.pop %v1807
        %v1818 = vrcp.pop %v1810
        %v1819 = vrcp.pop %v1813
        %v1820 = vrcp.pop %v1816
        %v1821 = vmul.f32 %v1798, %v1817
        %v1822 = vmul.f32 %v1800, %v1818
        %v1823 = vmul.f32 %v1802, %v1819
        %v1824 = vmul.f32 %v1804, %v1820
        %v1825 = vpack.c.bf16 %v1821, %v1821
        %v1826 = vpack.c.bf16 %v1822, %v1822
        %v1827 = vpack.c.bf16 %v1823, %v1823
        %v1828 = vpack.c.bf16 %v1824, %v1824
        %v1829 = vpack.c.bf16 %v1423, %v1423
        %v1830 = vpack.c.bf16 %v1475, %v1475
        %v1831 = vpack.c.bf16 %v1527, %v1527
        %v1832 = vpack.c.bf16 %v1579, %v1579
        %v1834 = vsel %vm1596, %v1825, 0
        %vm1836 = vcmask 1043456
        %v1838 = vsel %vm1836, %v1829, 0
        %1840 = vmatprep.subr.bf16.mxu0 0
        %1841 = vmatpush1.bf16.msra.mxu0 %v1838
        %1842 = vmatprep.subr.bf16.mxu0 0
        %1843 = vmatpush1.bf16.msra.mxu0 0
        %1844 = vmatprep.subr.bf16.mxu0 0
        %1845 = vmatpush1.bf16.msra.mxu0 0
        %1846 = vmatprep.subr.bf16.mxu0 0
        %1847 = vmatpush1.bf16.msra.mxu0 0
        %1848 = vmatprep.subr.bf16.mxu0 0
        %1849 = vmatpush1.bf16.msra.mxu0 0
        %1850 = vmatprep.subr.bf16.mxu0 0
        %1851 = vmatpush1.bf16.msra.mxu0 0
        %1852 = vmatprep.subr.bf16.mxu0 0
        %1853 = vmatpush1.bf16.msra.mxu0 0
        %1854 = vmatprep.subr.bf16.mxu0 0
        %1855 = vmatpush1.bf16.msra.mxu0 0
        %1856 = vmatprep.subr.bf16.mxu0 0
        %1857 = vmatpush1.bf16.msra.mxu0 0
        %1858 = vmatprep.subr.bf16.mxu0 0
        %1859 = vmatpush1.bf16.msra.mxu0 0
        %1860 = vmatprep.subr.bf16.mxu0 0
        %1861 = vmatpush1.bf16.msra.mxu0 0
        %1862 = vmatprep.subr.bf16.mxu0 0
        %1863 = vmatpush1.bf16.msra.mxu0 0
        %1864 = vmatprep.subr.bf16.mxu0 0
        %1865 = vmatpush1.bf16.msra.mxu0 0
        %1866 = vmatprep.subr.bf16.mxu0 0
        %1867 = vmatpush1.bf16.msra.mxu0 0
        %1868 = vmatprep.subr.bf16.mxu0 0
        %1869 = vmatpush1.bf16.msra.mxu0 0
        %1870 = vmatprep.subr.bf16.mxu0 0
        %1871 = vmatpush1.bf16.msra.mxu0 0
        %1872 = vmatprep.mubr.bf16.mxu0 0
        %1873 = vmatmul.mubr.bf16.gmra.mrb[0].mxu0 %v1834
        %v1874 = vpop.f32.mrb[0].mxu0
        %v1875 = vadd.f32 0.0, %v1874
        %v1876 = vpop.f32.mrb[0].mxu0
        %v1877 = vpop.f32.mrb[0].mxu0
        %v1878 = vpop.f32.mrb[0].mxu0
        %1879 = vdwg.mxu0
        %v1881 = vsel %vm1596, %v1826, 0
        %v1884 = vsel %vm1836, %v1830, 0
        %1886 = vmatprep.subr.bf16.mxu0 0
        %1887 = vmatpush1.bf16.msra.mxu0 %v1884
        %1888 = vmatprep.subr.bf16.mxu0 0
        %1889 = vmatpush1.bf16.msra.mxu0 0
        %1890 = vmatprep.subr.bf16.mxu0 0
        %1891 = vmatpush1.bf16.msra.mxu0 0
        %1892 = vmatprep.subr.bf16.mxu0 0
        %1893 = vmatpush1.bf16.msra.mxu0 0
        %1894 = vmatprep.subr.bf16.mxu0 0
        %1895 = vmatpush1.bf16.msra.mxu0 0
        %1896 = vmatprep.subr.bf16.mxu0 0
        %1897 = vmatpush1.bf16.msra.mxu0 0
        %1898 = vmatprep.subr.bf16.mxu0 0
        %1899 = vmatpush1.bf16.msra.mxu0 0
        %1900 = vmatprep.subr.bf16.mxu0 0
        %1901 = vmatpush1.bf16.msra.mxu0 0
        %1902 = vmatprep.subr.bf16.mxu0 0
        %1903 = vmatpush1.bf16.msra.mxu0 0
        %1904 = vmatprep.subr.bf16.mxu0 0
        %1905 = vmatpush1.bf16.msra.mxu0 0
        %1906 = vmatprep.subr.bf16.mxu0 0
        %1907 = vmatpush1.bf16.msra.mxu0 0
        %1908 = vmatprep.subr.bf16.mxu0 0
        %1909 = vmatpush1.bf16.msra.mxu0 0
        %1910 = vmatprep.subr.bf16.mxu0 0
        %1911 = vmatpush1.bf16.msra.mxu0 0
        %1912 = vmatprep.subr.bf16.mxu0 0
        %1913 = vmatpush1.bf16.msra.mxu0 0
        %1914 = vmatprep.subr.bf16.mxu0 0
        %1915 = vmatpush1.bf16.msra.mxu0 0
        %1916 = vmatprep.subr.bf16.mxu0 0
        %1917 = vmatpush1.bf16.msra.mxu0 0
        %1918 = vmatprep.mubr.bf16.mxu0 0
        %1919 = vmatmul.mubr.bf16.gmra.mrb[0].mxu0 %v1881
        %v1920 = vpop.f32.mrb[0].mxu0
        %v1921 = vadd.f32 0.0, %v1920
        %v1922 = vpop.f32.mrb[0].mxu0
        %v1923 = vpop.f32.mrb[0].mxu0
        %v1924 = vpop.f32.mrb[0].mxu0
        %1925 = vdwg.mxu0
        %v1927 = vsel %vm1596, %v1827, 0
        %v1930 = vsel %vm1836, %v1831, 0
        %1932 = vmatprep.subr.bf16.mxu0 0
        %1933 = vmatpush1.bf16.msra.mxu0 %v1930
        %1934 = vmatprep.subr.bf16.mxu0 0
        %1935 = vmatpush1.bf16.msra.mxu0 0
        %1936 = vmatprep.subr.bf16.mxu0 0
        %1937 = vmatpush1.bf16.msra.mxu0 0
        %1938 = vmatprep.subr.bf16.mxu0 0
        %1939 = vmatpush1.bf16.msra.mxu0 0
        %1940 = vmatprep.subr.bf16.mxu0 0
        %1941 = vmatpush1.bf16.msra.mxu0 0
        %1942 = vmatprep.subr.bf16.mxu0 0
        %1943 = vmatpush1.bf16.msra.mxu0 0
        %1944 = vmatprep.subr.bf16.mxu0 0
        %1945 = vmatpush1.bf16.msra.mxu0 0
        %1946 = vmatprep.subr.bf16.mxu0 0
        %1947 = vmatpush1.bf16.msra.mxu0 0
        %1948 = vmatprep.subr.bf16.mxu0 0
        %1949 = vmatpush1.bf16.msra.mxu0 0
        %1950 = vmatprep.subr.bf16.mxu0 0
        %1951 = vmatpush1.bf16.msra.mxu0 0
        %1952 = vmatprep.subr.bf16.mxu0 0
        %1953 = vmatpush1.bf16.msra.mxu0 0
        %1954 = vmatprep.subr.bf16.mxu0 0
        %1955 = vmatpush1.bf16.msra.mxu0 0
        %1956 = vmatprep.subr.bf16.mxu0 0
        %1957 = vmatpush1.bf16.msra.mxu0 0
        %1958 = vmatprep.subr.bf16.mxu0 0
        %1959 = vmatpush1.bf16.msra.mxu0 0
        %1960 = vmatprep.subr.bf16.mxu0 0
        %1961 = vmatpush1.bf16.msra.mxu0 0
        %1962 = vmatprep.subr.bf16.mxu0 0
        %1963 = vmatpush1.bf16.msra.mxu0 0
        %1964 = vmatprep.mubr.bf16.mxu0 0
        %1965 = vmatmul.mubr.bf16.gmra.mrb[0].mxu0 %v1927
        %v1966 = vpop.f32.mrb[0].mxu0
        %v1967 = vadd.f32 0.0, %v1966
        %v1968 = vpop.f32.mrb[0].mxu0
        %v1969 = vpop.f32.mrb[0].mxu0
        %v1970 = vpop.f32.mrb[0].mxu0
        %1971 = vdwg.mxu0
        %v1973 = vsel %vm1596, %v1828, 0
        %v1976 = vsel %vm1836, %v1832, 0
        %1978 = vmatprep.subr.bf16.mxu0 0
        %1979 = vmatpush1.bf16.msra.mxu0 %v1976
        %1980 = vmatprep.subr.bf16.mxu0 0
        %1981 = vmatpush1.bf16.msra.mxu0 0
        %1982 = vmatprep.subr.bf16.mxu0 0
        %1983 = vmatpush1.bf16.msra.mxu0 0
        %1984 = vmatprep.subr.bf16.mxu0 0
        %1985 = vmatpush1.bf16.msra.mxu0 0
        %1986 = vmatprep.subr.bf16.mxu0 0
        %1987 = vmatpush1.bf16.msra.mxu0 0
        %1988 = vmatprep.subr.bf16.mxu0 0
        %1989 = vmatpush1.bf16.msra.mxu0 0
        %1990 = vmatprep.subr.bf16.mxu0 0
        %1991 = vmatpush1.bf16.msra.mxu0 0
        %1992 = vmatprep.subr.bf16.mxu0 0
        %1993 = vmatpush1.bf16.msra.mxu0 0
        %1994 = vmatprep.subr.bf16.mxu0 0
        %1995 = vmatpush1.bf16.msra.mxu0 0
        %1996 = vmatprep.subr.bf16.mxu0 0
        %1997 = vmatpush1.bf16.msra.mxu0 0
        %1998 = vmatprep.subr.bf16.mxu0 0
        %1999 = vmatpush1.bf16.msra.mxu0 0
        %2000 = vmatprep.subr.bf16.mxu0 0
        %2001 = vmatpush1.bf16.msra.mxu0 0
        %2002 = vmatprep.subr.bf16.mxu0 0
        %2003 = vmatpush1.bf16.msra.mxu0 0
        %2004 = vmatprep.subr.bf16.mxu0 0
        %2005 = vmatpush1.bf16.msra.mxu0 0
        %2006 = vmatprep.subr.bf16.mxu0 0
        %2007 = vmatpush1.bf16.msra.mxu0 0
        %2008 = vmatprep.subr.bf16.mxu0 0
        %2009 = vmatpush1.bf16.msra.mxu0 0
        %2010 = vmatprep.mubr.bf16.mxu0 0
        %2011 = vmatmul.mubr.bf16.gmra.mrb[0].mxu0 %v1973
        %v2012 = vpop.f32.mrb[0].mxu0
        %v2013 = vadd.f32 0.0, %v2012
        %v2014 = vpop.f32.mrb[0].mxu0
        %v2015 = vpop.f32.mrb[0].mxu0
        %v2016 = vpop.f32.mrb[0].mxu0
        %2017 = vdwg.mxu0
        %v2018 = vpack.c.bf16 %v1875, %v1875
        %v2019 = vpack.c.bf16 %v1921, %v1921
        %v2020 = vpack.c.bf16 %v1967, %v1967
        %v2021 = vpack.c.bf16 %v2013, %v2013
        %v2022 = vld [vmem:[%s745] sm:$0xf]
        %v2023 = vld [vmem:[%s745 + $0x4] sm:$0xf]
        %v2024 = vld [vmem:[%s745 + $0x8] sm:$0xf]
        %v2025 = vld [vmem:[%s745 + $0xc] sm:$0xf]
        %v2027 = vsel %vm1596, %v2018, 0
        %v2030 = vsel %vm1836, %v2022, 0
        %2032 = vmatprep.subr.bf16.mxu0 0
        %2033 = vmatpush1.bf16.msra.mxu0 %v2030
        %2034 = vmatprep.subr.bf16.mxu0 0
        %2035 = vmatpush1.bf16.msra.mxu0 0
        %2036 = vmatprep.subr.bf16.mxu0 0
        %2037 = vmatpush1.bf16.msra.mxu0 0
        %2038 = vmatprep.subr.bf16.mxu0 0
        %2039 = vmatpush1.bf16.msra.mxu0 0
        %2040 = vmatprep.subr.bf16.mxu0 0
        %2041 = vmatpush1.bf16.msra.mxu0 0
        %2042 = vmatprep.subr.bf16.mxu0 0
        %2043 = vmatpush1.bf16.msra.mxu0 0
        %2044 = vmatprep.subr.bf16.mxu0 0
        %2045 = vmatpush1.bf16.msra.mxu0 0
        %2046 = vmatprep.subr.bf16.mxu0 0
        %2047 = vmatpush1.bf16.msra.mxu0 0
        %2048 = vmatprep.subr.bf16.mxu0 0
        %2049 = vmatpush1.bf16.msra.mxu0 0
        %2050 = vmatprep.subr.bf16.mxu0 0
        %2051 = vmatpush1.bf16.msra.mxu0 0
        %2052 = vmatprep.subr.bf16.mxu0 0
        %2053 = vmatpush1.bf16.msra.mxu0 0
        %2054 = vmatprep.subr.bf16.mxu0 0
        %2055 = vmatpush1.bf16.msra.mxu0 0
        %2056 = vmatprep.subr.bf16.mxu0 0
        %2057 = vmatpush1.bf16.msra.mxu0 0
        %2058 = vmatprep.subr.bf16.mxu0 0
        %2059 = vmatpush1.bf16.msra.mxu0 0
        %2060 = vmatprep.subr.bf16.mxu0 0
        %2061 = vmatpush1.bf16.msra.mxu0 0
        %2062 = vmatprep.subr.bf16.mxu0 0
        %2063 = vmatpush1.bf16.msra.mxu0 0
        %2064 = vmatprep.mubr.bf16.mxu0 0
        %2065 = vmatmul.mubr.bf16.gmra.mrb[0].mxu0 %v2027
        %v2066 = vpop.f32.mrb[0].mxu0
        %v2067 = vadd.f32 0.0, %v2066
        %v2068 = vpop.f32.mrb[0].mxu0
        %v2069 = vpop.f32.mrb[0].mxu0
        %v2070 = vpop.f32.mrb[0].mxu0
        %2071 = vdwg.mxu0
        %v2073 = vsel %vm1596, %v2019, 0
        %v2076 = vsel %vm1836, %v2023, 0
        %2078 = vmatprep.subr.bf16.mxu0 0
        %2079 = vmatpush1.bf16.msra.mxu0 %v2076
        %2080 = vmatprep.subr.bf16.mxu0 0
        %2081 = vmatpush1.bf16.msra.mxu0 0
        %2082 = vmatprep.subr.bf16.mxu0 0
        %2083 = vmatpush1.bf16.msra.mxu0 0
        %2084 = vmatprep.subr.bf16.mxu0 0
        %2085 = vmatpush1.bf16.msra.mxu0 0
        %2086 = vmatprep.subr.bf16.mxu0 0
        %2087 = vmatpush1.bf16.msra.mxu0 0
        %2088 = vmatprep.subr.bf16.mxu0 0
        %2089 = vmatpush1.bf16.msra.mxu0 0
        %2090 = vmatprep.subr.bf16.mxu0 0
        %2091 = vmatpush1.bf16.msra.mxu0 0
        %2092 = vmatprep.subr.bf16.mxu0 0
        %2093 = vmatpush1.bf16.msra.mxu0 0
        %2094 = vmatprep.subr.bf16.mxu0 0
        %2095 = vmatpush1.bf16.msra.mxu0 0
        %2096 = vmatprep.subr.bf16.mxu0 0
        %2097 = vmatpush1.bf16.msra.mxu0 0
        %2098 = vmatprep.subr.bf16.mxu0 0
        %2099 = vmatpush1.bf16.msra.mxu0 0
        %2100 = vmatprep.subr.bf16.mxu0 0
        %2101 = vmatpush1.bf16.msra.mxu0 0
        %2102 = vmatprep.subr.bf16.mxu0 0
        %2103 = vmatpush1.bf16.msra.mxu0 0
        %2104 = vmatprep.subr.bf16.mxu0 0
        %2105 = vmatpush1.bf16.msra.mxu0 0
        %2106 = vmatprep.subr.bf16.mxu0 0
        %2107 = vmatpush1.bf16.msra.mxu0 0
        %2108 = vmatprep.subr.bf16.mxu0 0
        %2109 = vmatpush1.bf16.msra.mxu0 0
        %2110 = vmatprep.mubr.bf16.mxu0 0
        %2111 = vmatmul.mubr.bf16.gmra.mrb[0].mxu0 %v2073
        %v2112 = vpop.f32.mrb[0].mxu0
        %v2113 = vadd.f32 0.0, %v2112
        %v2114 = vpop.f32.mrb[0].mxu0
        %v2115 = vpop.f32.mrb[0].mxu0
        %v2116 = vpop.f32.mrb[0].mxu0
        %2117 = vdwg.mxu0
        %v2119 = vsel %vm1596, %v2020, 0
        %v2122 = vsel %vm1836, %v2024, 0
        %2124 = vmatprep.subr.bf16.mxu0 0
        %2125 = vmatpush1.bf16.msra.mxu0 %v2122
        %2126 = vmatprep.subr.bf16.mxu0 0
        %2127 = vmatpush1.bf16.msra.mxu0 0
        %2128 = vmatprep.subr.bf16.mxu0 0
        %2129 = vmatpush1.bf16.msra.mxu0 0
        %2130 = vmatprep.subr.bf16.mxu0 0
        %2131 = vmatpush1.bf16.msra.mxu0 0
        %2132 = vmatprep.subr.bf16.mxu0 0
        %2133 = vmatpush1.bf16.msra.mxu0 0
        %2134 = vmatprep.subr.bf16.mxu0 0
        %2135 = vmatpush1.bf16.msra.mxu0 0
        %2136 = vmatprep.subr.bf16.mxu0 0
        %2137 = vmatpush1.bf16.msra.mxu0 0
        %2138 = vmatprep.subr.bf16.mxu0 0
        %2139 = vmatpush1.bf16.msra.mxu0 0
        %2140 = vmatprep.subr.bf16.mxu0 0
        %2141 = vmatpush1.bf16.msra.mxu0 0
        %2142 = vmatprep.subr.bf16.mxu0 0
        %2143 = vmatpush1.bf16.msra.mxu0 0
        %2144 = vmatprep.subr.bf16.mxu0 0
        %2145 = vmatpush1.bf16.msra.mxu0 0
        %2146 = vmatprep.subr.bf16.mxu0 0
        %2147 = vmatpush1.bf16.msra.mxu0 0
        %2148 = vmatprep.subr.bf16.mxu0 0
        %2149 = vmatpush1.bf16.msra.mxu0 0
        %2150 = vmatprep.subr.bf16.mxu0 0
        %2151 = vmatpush1.bf16.msra.mxu0 0
        %2152 = vmatprep.subr.bf16.mxu0 0
        %2153 = vmatpush1.bf16.msra.mxu0 0
        %2154 = vmatprep.subr.bf16.mxu0 0
        %2155 = vmatpush1.bf16.msra.mxu0 0
        %2156 = vmatprep.mubr.bf16.mxu0 0
        %2157 = vmatmul.mubr.bf16.gmra.mrb[0].mxu0 %v2119
        %v2158 = vpop.f32.mrb[0].mxu0
        %v2159 = vadd.f32 0.0, %v2158
        %v2160 = vpop.f32.mrb[0].mxu0
        %v2161 = vpop.f32.mrb[0].mxu0
        %v2162 = vpop.f32.mrb[0].mxu0
        %2163 = vdwg.mxu0
        %v2165 = vsel %vm1596, %v2021, 0
        %v2168 = vsel %vm1836, %v2025, 0
        %2170 = vmatprep.subr.bf16.mxu0 0
        %2171 = vmatpush1.bf16.msra.mxu0 %v2168
        %2172 = vmatprep.subr.bf16.mxu0 0
        %2173 = vmatpush1.bf16.msra.mxu0 0
        %2174 = vmatprep.subr.bf16.mxu0 0
        %2175 = vmatpush1.bf16.msra.mxu0 0
        %2176 = vmatprep.subr.bf16.mxu0 0
        %2177 = vmatpush1.bf16.msra.mxu0 0
        %2178 = vmatprep.subr.bf16.mxu0 0
        %2179 = vmatpush1.bf16.msra.mxu0 0
        %2180 = vmatprep.subr.bf16.mxu0 0
        %2181 = vmatpush1.bf16.msra.mxu0 0
        %2182 = vmatprep.subr.bf16.mxu0 0
        %2183 = vmatpush1.bf16.msra.mxu0 0
        %2184 = vmatprep.subr.bf16.mxu0 0
        %2185 = vmatpush1.bf16.msra.mxu0 0
        %2186 = vmatprep.subr.bf16.mxu0 0
        %2187 = vmatpush1.bf16.msra.mxu0 0
        %2188 = vmatprep.subr.bf16.mxu0 0
        %2189 = vmatpush1.bf16.msra.mxu0 0
        %2190 = vmatprep.subr.bf16.mxu0 0
        %2191 = vmatpush1.bf16.msra.mxu0 0
        %2192 = vmatprep.subr.bf16.mxu0 0
        %2193 = vmatpush1.bf16.msra.mxu0 0
        %2194 = vmatprep.subr.bf16.mxu0 0
        %2195 = vmatpush1.bf16.msra.mxu0 0
        %2196 = vmatprep.subr.bf16.mxu0 0
        %2197 = vmatpush1.bf16.msra.mxu0 0
        %2198 = vmatprep.subr.bf16.mxu0 0
        %2199 = vmatpush1.bf16.msra.mxu0 0
        %2200 = vmatprep.subr.bf16.mxu0 0
        %2201 = vmatpush1.bf16.msra.mxu0 0
        %2202 = vmatprep.mubr.bf16.mxu0 0
        %2203 = vmatmul.mubr.bf16.gmra.mrb[0].mxu0 %v2165
        %v2204 = vpop.f32.mrb[0].mxu0
        %v2205 = vadd.f32 0.0, %v2204
        %v2206 = vpop.f32.mrb[0].mxu0
        %v2207 = vpop.f32.mrb[0].mxu0
        %v2208 = vpop.f32.mrb[0].mxu0
        %2209 = vdwg.mxu0
        %v2210 = vsel %vm795, %v2067, 0.0
        %v2211 = vsel %vm795, %v2113, 0.0
        %v2212 = vadd.f32 %v2210, %v2211
        %v2213 = vsel %vm795, %v2159, 0.0
        %v2214 = vadd.f32 %v2212, %v2213
        %v2215 = vsel %vm795, %v2205, 0.0
        %v2216 = vadd.f32 %v2214, %v2215
        %v2217 = vld [vmem:[%s748] sm:$0x1]
        %v2219 = vlaneseq
        %v2220 = vshrl.u32 %v2219, 7
        %v2221 = vsub.s32 0, %v2220
        %v2222 = vrot.slane %v2217, %v2221
        %v2224 = vadd.f32 %v2216, %v2222
        %v2225 = vld [vmem:[%s751] sm:$0x1]
        %v2227 = vlaneseq
        %v2228 = vshrl.u32 %v2227, 7
        %v2229 = vsub.s32 0, %v2228
        %v2230 = vrot.slane %v2225, %v2229
        %v2232 = vmul.f32 %v2230, %v2224
        %v2233 = vadd.f32 %v792, %v2232
        %v2234 = vld [vmem:[%s754] sm:$0x1]
        %v2235 = vld [vmem:[%s757] sm:$0x1]
        %v2236 = vsel %vm795, %v2233, 0.0
        %2237 = vadd.xlane.f32.xlu0 %v2236
        %v2238 = vpop.xlane.xlu0 %2237
        %v2239 = vmul.f32 %v2238, %v799
        %v2240 = vsub.f32 %v2233, %v2239
        %v2241 = vmul.f32 %v2240, %v2240
        %v2242 = vsel %vm795, %v2241, 0.0
        %2243 = vadd.xlane.f32.xlu0 %v2242
        %v2244 = vpop.xlane.xlu0 %2243
        %v2245 = vmul.f32 %v2244, %v799
        %v2246 = vadd.f32 %v2245, 1e-06
        %v2247 = vrsqrt.pop %v2246
        %v2248 = vmul.f32 %v2240, %v2247
        %v2250 = vlaneseq
        %v2251 = vshrl.u32 %v2250, 7
        %v2252 = vsub.s32 0, %v2251
        %v2253 = vrot.slane %v2234, %v2252
        %v2255 = vmul.f32 %v2248, %v2253
        %v2257 = vlaneseq
        %v2258 = vshrl.u32 %v2257, 7
        %v2259 = vsub.s32 0, %v2258
        %v2260 = vrot.slane %v2235, %v2259
        %v2262 = vadd.f32 %v2255, %v2260
        %v2263 = vpack.c.bf16 %v2262, %v2262
        %v2264 = vld [vmem:[%s762] sm:$0xf]
        %v2265 = vld [vmem:[%s762 + $0x4] sm:$0xf]
        %v2266 = vld [vmem:[%s762 + $0x8] sm:$0xf]
        %v2267 = vld [vmem:[%s762 + $0xc] sm:$0xf]
        %v2268 = vld [vmem:[%s765] sm:$0x1]
        %v2270 = vlaneseq
        %v2271 = vshrl.u32 %v2270, 7
        %v2272 = vsub.s32 0, %v2271
        %v2273 = vrot.slane %v2268, %v2272
        %v2279 = vunpack.c.l.b16 %v2264
        %v2280 = vunpack.c.l.b16 %v2265
        %v2281 = vunpack.c.l.b16 %v2266
        %v2282 = vunpack.c.l.b16 %v2267
        %v2283 = vpack.c.b16 %v2280, %v2279
        %v2284 = vpack.c.b16 %v2282, %v2281
        %v2288 = vsel %vm795, %v2263, 0
        %2290 = vmatprep.subr.bf16.mxu0 0
        %2291 = vmatpush1.bf16.msra.mxu0 %v2283
        %2292 = vmatprep.subr.bf16.mxu0 0
        %2293 = vmatpush1.bf16.msra.mxu0 %v2284
        %2294 = vmatprep.subr.bf16.mxu0 0
        %2295 = vmatpush1.bf16.msra.mxu0 0
        %2296 = vmatprep.subr.bf16.mxu0 0
        %2297 = vmatpush1.bf16.msra.mxu0 0
        %2298 = vmatprep.subr.bf16.mxu0 0
        %2299 = vmatpush1.bf16.msra.mxu0 0
        %2300 = vmatprep.subr.bf16.mxu0 0
        %2301 = vmatpush1.bf16.msra.mxu0 0
        %2302 = vmatprep.subr.bf16.mxu0 0
        %2303 = vmatpush1.bf16.msra.mxu0 0
        %2304 = vmatprep.subr.bf16.mxu0 0
        %2305 = vmatpush1.bf16.msra.mxu0 0
        %2306 = vmatprep.subr.bf16.mxu0 0
        %2307 = vmatpush1.bf16.msra.mxu0 0
        %2308 = vmatprep.subr.bf16.mxu0 0
        %2309 = vmatpush1.bf16.msra.mxu0 0
        %2310 = vmatprep.subr.bf16.mxu0 0
        %2311 = vmatpush1.bf16.msra.mxu0 0
        %2312 = vmatprep.subr.bf16.mxu0 0
        %2313 = vmatpush1.bf16.msra.mxu0 0
        %2314 = vmatprep.subr.bf16.mxu0 0
        %2315 = vmatpush1.bf16.msra.mxu0 0
        %2316 = vmatprep.subr.bf16.mxu0 0
        %2317 = vmatpush1.bf16.msra.mxu0 0
        %2318 = vmatprep.subr.bf16.mxu0 0
        %2319 = vmatpush1.bf16.msra.mxu0 0
        %2320 = vmatprep.subr.bf16.mxu0 0
        %2321 = vmatpush1.bf16.msra.mxu0 0
        %2322 = vmatprep.mubr.bf16.mxu0 0
        %2323 = vmatmul.mubr.bf16.gmra.mrb[0].mxu0 %v2288
        %v2324 = vpop.f32.mrb[0].mxu0
        %v2325 = vadd.f32 %v2273, %v2324
        %v2326 = vpop.f32.mrb[0].mxu0
        %v2327 = vpop.f32.mrb[0].mxu0
        %v2328 = vpop.f32.mrb[0].mxu0
        %2329 = vdwg.mxu0
        %v2330 = vmul.f32 %v2325, 0.5
        %v2331 = vmul.f32 %v2325, 0.70710677
        %vm2332 = vcmp.ge.f32.partialorder %v2331, 0.0
        %v2333 = vsel %vm2332, 1.0, -1.0
        %v2334 = vand.u32 2147483647, %v2331
        %v2335 = vmul.f32 %v2334, 0.3275911
        %v2336 = vadd.f32 %v2335, 1.0
        %v2337 = vrcp.pop %v2336
        %v2338 = vmul.f32 1.0, %v2337
        %v2339 = vmul.f32 %v2338, 1.0614054
        %v2340 = vadd.f32 %v2339, -1.4531521
        %v2341 = vmul.f32 %v2340, %v2338
        %v2342 = vadd.f32 %v2341, 1.4214138
        %v2343 = vmul.f32 %v2342, %v2338
        %v2344 = vadd.f32 %v2343, -0.28449672
        %v2345 = vmul.f32 %v2344, %v2338
        %v2346 = vadd.f32 %v2345, 0.2548296
        %v2347 = vmul.f32 %v2346, %v2338
        %v2348 = vsub.f32 0.0, %v2334
        %v2349 = vmul.f32 %v2348, %v2334
        %v2350 = vmul.f32 %v2349, 1.442695
        %v2351 = vpow.pop %v2350
        %v2352 = vmul.f32 %v2347, %v2351
        %v2353 = vsub.f32 1.0, %v2352
        %v2354 = vmul.f32 %v2333, %v2353
        %v2355 = vadd.f32 %v2354, 1.0
        %v2356 = vmul.f32 %v2330, %v2355
        %v2357 = vpack.c.bf16 %v2356, %v2356
        %v2358 = vld [vmem:[%s770] sm:$0xf]
        %v2359 = vld [vmem:[%s770 + $0x4] sm:$0xf]
        %v2360 = vld [vmem:[%s770 + $0x8] sm:$0xf]
        %v2361 = vld [vmem:[%s770 + $0xc] sm:$0xf]
        %v2362 = vld [vmem:[%s770 + $0x10] sm:$0xf]
        %v2363 = vld [vmem:[%s770 + $0x14] sm:$0xf]
        %v2364 = vld [vmem:[%s770 + $0x18] sm:$0xf]
        %v2365 = vld [vmem:[%s770 + $0x1c] sm:$0xf]
        %v2366 = vld [vmem:[%s773] sm:$0x1]
        %v2368 = vlaneseq
        %v2369 = vshrl.u32 %v2368, 7
        %v2370 = vsub.s32 0, %v2369
        %v2371 = vrot.slane %v2366, %v2370
        %v2381 = vunpack.c.l.b16 %v2358
        %v2382 = vunpack.c.l.b16 %v2359
        %v2383 = vunpack.c.l.b16 %v2360
        %v2384 = vunpack.c.l.b16 %v2361
        %v2385 = vunpack.c.l.b16 %v2362
        %v2386 = vunpack.c.l.b16 %v2363
        %v2387 = vunpack.c.l.b16 %v2364
        %v2388 = vunpack.c.l.b16 %v2365
        %v2389 = vpack.c.b16 %v2382, %v2381
        %v2390 = vpack.c.b16 %v2384, %v2383
        %v2391 = vpack.c.b16 %v2386, %v2385
        %v2392 = vpack.c.b16 %v2388, %v2387
        %vm2397 = vcmask 523264
        %v2399 = vsel %vm2397, %v2357, 0
        %2401 = vmatprep.subr.bf16.mxu0 0
        %2402 = vmatpush1.bf16.msra.mxu0 %v2389
        %2403 = vmatprep.subr.bf16.mxu0 0
        %2404 = vmatpush1.bf16.msra.mxu0 %v2390
        %2405 = vmatprep.subr.bf16.mxu0 0
        %2406 = vmatpush1.bf16.msra.mxu0 %v2391
        %2407 = vmatprep.subr.bf16.mxu0 0
        %2408 = vmatpush1.bf16.msra.mxu0 %v2392
        %2409 = vmatprep.subr.bf16.mxu0 0
        %2410 = vmatpush1.bf16.msra.mxu0 0
        %2411 = vmatprep.subr.bf16.mxu0 0
        %2412 = vmatpush1.bf16.msra.mxu0 0
        %2413 = vmatprep.subr.bf16.mxu0 0
        %2414 = vmatpush1.bf16.msra.mxu0 0
        %2415 = vmatprep.subr.bf16.mxu0 0
        %2416 = vmatpush1.bf16.msra.mxu0 0
        %2417 = vmatprep.subr.bf16.mxu0 0
        %2418 = vmatpush1.bf16.msra.mxu0 0
        %2419 = vmatprep.subr.bf16.mxu0 0
        %2420 = vmatpush1.bf16.msra.mxu0 0
        %2421 = vmatprep.subr.bf16.mxu0 0
        %2422 = vmatpush1.bf16.msra.mxu0 0
        %2423 = vmatprep.subr.bf16.mxu0 0
        %2424 = vmatpush1.bf16.msra.mxu0 0
        %2425 = vmatprep.subr.bf16.mxu0 0
        %2426 = vmatpush1.bf16.msra.mxu0 0
        %2427 = vmatprep.subr.bf16.mxu0 0
        %2428 = vmatpush1.bf16.msra.mxu0 0
        %2429 = vmatprep.subr.bf16.mxu0 0
        %2430 = vmatpush1.bf16.msra.mxu0 0
        %2431 = vmatprep.subr.bf16.mxu0 0
        %2432 = vmatpush1.bf16.msra.mxu0 0
        %2433 = vmatprep.mubr.bf16.mxu0 0
        %2434 = vmatmul.mubr.bf16.gmra.mrb[0].mxu0 %v2399
        %v2435 = vpop.f32.mrb[0].mxu0
        %v2436 = vadd.f32 %v2371, %v2435
        %v2437 = vpop.f32.mrb[0].mxu0
        %v2438 = vpop.f32.mrb[0].mxu0
        %v2439 = vpop.f32.mrb[0].mxu0
        %2440 = vdwg.mxu0
        %v2441 = vld [vmem:[%s776] sm:$0x1]
        %v2443 = vlaneseq
        %v2444 = vshrl.u32 %v2443, 7
        %v2445 = vsub.s32 0, %v2444
        %v2446 = vrot.slane %v2441, %v2445
        %v2448 = vmul.f32 %v2446, %v2436
        %v2449 = vadd.f32 %v2233, %v2448
        %2450 = vst.msk [vmem:[%s791] sm:$0xff] %vm795, %v2449
        %p2451 = scmp.eq.s32.totalorder %s34, 1
        // Predicated region
        $region97: #{tpu_custom_call.1} parent=91 // pred_check
          %p2452 = pneg %p2451
        $region98: #{tpu_custom_call.1} parent=91 // pred_check_branch
          %2454 = sbr.rel (%p2452) target = $region100
        $region99: #{tpu_custom_call.1} parent=91 // pred_region
          %v2455 = vld [vmem:[%s16] sm:$0x1]
          %v2456 = vld [vmem:[%s17] sm:$0x1]
          %v2457 = vsel %vm795, %v2449, 0.0
          %2458 = vadd.xlane.f32.xlu0 %v2457
          %v2459 = vpop.xlane.xlu0 %2458
          %v2460 = vmul.f32 %v2459, %v799
          %v2461 = vsub.f32 %v2449, %v2460
          %v2462 = vmul.f32 %v2461, %v2461
          %v2463 = vsel %vm795, %v2462, 0.0
          %2464 = vadd.xlane.f32.xlu0 %v2463
          %v2465 = vpop.xlane.xlu0 %2464
          %v2466 = vmul.f32 %v2465, %v799
          %v2467 = vadd.f32 %v2466, 1e-06
          %v2468 = vrsqrt.pop %v2467
          %v2469 = vmul.f32 %v2461, %v2468
          %v2471 = vlaneseq
          %v2472 = vshrl.u32 %v2471, 7
          %v2473 = vsub.s32 0, %v2472
          %v2474 = vrot.slane %v2455, %v2473
          %v2476 = vmul.f32 %v2469, %v2474
          %v2478 = vlaneseq
          %v2479 = vshrl.u32 %v2478, 7
          %v2480 = vsub.s32 0, %v2479
          %v2481 = vrot.slane %v2456, %v2480
          %v2483 = vadd.f32 %v2476, %v2481
          %2484 = vst.msk [vmem:[%s791] sm:$0xff] %vm795, %v2483
        $region100: #{tpu_custom_call.1} parent=91 // pred_fallthru
          _
        // Predicated region
        $region101: #{tpu_custom_call.1} parent=91 // pred_check
          %p2485 = pneg %p503
        $region102: #{tpu_custom_call.1} parent=91 // pred_check_branch
          %2487 = sbr.rel (%p2485) target = $region104
        $region103: #{tpu_custom_call.1} parent=91 // pred_region
          %s2489 = ssub.s32 256, 256
          %2490 = vsyncadd [#allocation3], %s2489
          %s2491 = sshll.u32 [#allocation2], 4
          %s2492 = int_to_ptr.vmem [resolvable:$true] %s2491
          %2497 = dma.vmem_to_hbm [thread:$0]  %s2492, 256, %s18, [#allocation3], 128, 128, 8
        $region104: #{tpu_custom_call.1} parent=91 // pred_fallthru
          _
        // Predicated region
        $region105: #{tpu_custom_call.1} parent=91 // pred_check
          %p2498 = pneg %p503
        $region106: #{tpu_custom_call.1} parent=91 // pred_check_branch
          %2500 = sbr.rel (%p2498) target = $region108
        $region107: #{tpu_custom_call.1} parent=91 // pred_region
          %2501 = dma.done [#allocation3], 256
        $region108: #{tpu_custom_call.1} parent=91 // pred_fallthru
          _
      $region92: #{tpu_custom_call.1} parent=5 // pred_fallthru
        _
      %p2502 = scmp.le.s32.totalorder 2, %s25
      // Predicated region
      $region109: #{tpu_custom_call.1} parent=5 // pred_check
        %p2503 = pneg %p2502
      $region110: #{tpu_custom_call.1} parent=5 // pred_check_branch
        %2505 = sbr.rel (%p2503) target = $region112
      $region111: #{tpu_custom_call.1} parent=5 // pred_region
        %s2506 = ssub.s32 %s25, 2
      $region112: #{tpu_custom_call.1} parent=5 // pred_fallthru
        _
    $region6: #{tpu_custom_call.1} parent=1 // loop_footer
      %s29 = sadd.s32 1, %s25
    $region7: #{tpu_custom_call.1} parent=1 // loop_footer_branch
      %24 = sbr.rel target = $region3
    $region8: #{tpu_custom_call.1} parent=1 // loop_exit
      _
    %2507 = vsyncpa [#allocation3], 1
    %s2508 = scalar_lea.sflag [#allocation3], 1
    %2509 = vsyncpa %s2508, 1

</llo_original>
